<compile_context>
chip_gen: v7x
topology: tpu7x:2x2x1
jax: 0.10.0
libtpu: 0.0.40
codegen_flags: <defaults>
</compile_context>

<pallas_src>
import jax
import jax.numpy as jnp
from jax.experimental import pallas as pl
from jax.experimental.pallas import tpu as pltpu

KSIZE = 7   # spatial-attention kernel size (CBAM default)
PAD = 3     # padding for kernel_size == 7


def cbam_kernel(x_ref, ca_ref, toep_ref, o_ref, pad_ref):
    # x_ref:    (1, C, H, W)  input block (VMEM), NCHW layout (W = lanes)
    # ca_ref:   (1, C, 1, W)  per-channel attention gate, pre-broadcast along W
    # toep_ref: (2*7, W, W)   banded Toeplitz matrices (one per (c, dy) kernel row)
    # o_ref:    (1, C, H, W)  output block (VMEM)
    # pad_ref:  (2, H+6, W)   height-padded [mean, max] maps (VMEM scratch)
    _, C, H, W = x_ref.shape

    # ---------------- Channel attention (apply precomputed gate) ----------
    x1 = x_ref[0] * ca_ref[0]                       # (C,H,W) * (C,1,W)

    # ---------------- Spatial attention ------------------------------------
    # Channel mean/max are leading-axis reductions: C lane-dense slab ops.
    cm = jnp.mean(x1, axis=0)                       # (H, W)
    cx = jnp.max(x1, axis=0)                        # (H, W)

    # Height-padded maps.  Only the 3-row halos need zeroing; rewrite them
    # every step so the kernel is correct even when the batch axis is sharded
    # across TensorCores (scratch is per-core and never zero-initialized).
    zhalo = jnp.zeros((PAD, W), jnp.float32)
    for c in range(2):
        pad_ref[c, 0:PAD, :] = zhalo
        pad_ref[c, PAD + H:2 * PAD + H, :] = zhalo
    pad_ref[0, PAD:PAD + H, :] = cm.astype(jnp.float32)
    pad_ref[1, PAD:PAD + H, :] = cx.astype(jnp.float32)

    # 7x7 conv (2 -> 1 channel): for each (input channel, kernel row) load one
    # (H, W) slab (sublane offset only, lane offset always 0) and fold the 7
    # width taps into a banded (W, W) Toeplitz matmul on the MXU, acc in f32.
    acc = jnp.zeros((H, W), jnp.float32)
    for c in range(2):
        for dy in range(KSIZE):
            acc = acc + jnp.dot(
                pad_ref[c, dy:dy + H, :],
                toep_ref[c * KSIZE + dy],
                preferred_element_type=jnp.float32)

    # sigmoid: exp on the EUP, approximate reciprocal also on the EUP
    # (frees the VALU for the scale multiplies below).
    sa = pl.reciprocal(1.0 + jnp.exp(-acc), approx=True)          # (H, W)

    # Final scale: leading-axis broadcast of the lane-dense (H, W) map.
    o_ref[0] = (x1 * sa[None, :, :]).astype(o_ref.dtype)


def _spatial_toeplitz(sp_w, width):
    """Fold the width taps of the (1, 2, 7, 7) conv weight into banded
    Toeplitz matrices T with T[c*7+dy, w_in, w_out] = w[0, c, dy, w_in-w_out+3]
    (zero outside the band), so `row_slab @ T[c*7+dy]` realizes the width
    direction of the zero-padded cross-correlation."""
    wk = sp_w.reshape(2 * KSIZE, KSIZE).astype(jnp.float32)       # (14, 7)
    w_in = jnp.arange(width)[:, None]
    w_out = jnp.arange(width)[None, :]
    dx = w_in - w_out + PAD                                       # (W, W)
    valid = (dx >= 0) & (dx < KSIZE)
    band = wk[:, jnp.clip(dx, 0, KSIZE - 1)]                      # (14, W, W)
    return jnp.where(valid[None], band, 0.0)


def _round_up(v, m):
    return ((v + m - 1) // m) * m


@jax.jit
def cbam_forward(x_nchw, fc_w, fc_b, sp_w):
    """CBAM forward.  x_nchw: (N, C, H, W); fc_w: (C, C) squeezed 1x1-conv
    weight; fc_b: (C,); sp_w: (1, 2, 7, 7).  Returns (N, C, H, W)."""
    N, C, H, W = x_nchw.shape

    # Channel-attention gate hoisted out of the per-batch grid loop: one
    # well-shaped (N, C) @ (C, C) matmul + sigmoid (tiny, N*C values) instead
    # of N degenerate single-row MXU matmuls inside the kernel.
    pooled = jnp.mean(x_nchw.astype(jnp.float32), axis=(2, 3))            # (N, C)
    ca = jax.nn.sigmoid(pooled @ jnp.transpose(fc_w).astype(jnp.float32)
                        + fc_b.astype(jnp.float32))                       # (N, C)
    # Pre-broadcast along W so the in-kernel multiply is a plain sublane
    # broadcast of a lane-dense row.
    ca = jnp.broadcast_to(ca[:, :, None, None], (N, C, 1, W)).astype(x_nchw.dtype)

    toep = _spatial_toeplitz(sp_w, W)                                     # (14,W,W)

    # Explicit VMEM budget: double-buffered in/out blocks + resident constants
    # + scratch, with 2x headroom, clamped to stay inside every chip's limit.
    bpe = jnp.dtype(x_nchw.dtype).itemsize
    blk = C * _round_up(H, 8) * _round_up(W, 128) * bpe
    const = (2 * KSIZE * _round_up(W, 8) * _round_up(W, 128) * 4
             + C * 8 * _round_up(W, 128) * bpe)
    scratch = 2 * _round_up(H + 2 * PAD, 8) * _round_up(W, 128) * 4
    vmem_bytes = int(min(max(2 * (4 * blk + 2 * const + scratch), 16 << 20),
                         48 << 20))

    out = pl.pallas_call(
        cbam_kernel,
        out_shape=jax.ShapeDtypeStruct((N, C, H, W), x_nchw.dtype),
        grid=(N,),
        in_specs=[
            pl.BlockSpec((1, C, H, W), lambda n: (n, 0, 0, 0)),
            pl.BlockSpec((1, C, 1, W), lambda n: (n, 0, 0, 0)),
            pl.BlockSpec((2 * KSIZE, W, W), lambda n: (0, 0, 0)),
        ],
        out_specs=pl.BlockSpec((1, C, H, W), lambda n: (n, 0, 0, 0)),
        scratch_shapes=[pltpu.VMEM((2, H + 2 * PAD, W), jnp.float32)],
        compiler_params=pltpu.CompilerParams(
            dimension_semantics=("parallel",),    # batch elems are independent
            vmem_limit_bytes=vmem_bytes),
    )(x_nchw, ca, toep)
    return out


def ref_cbam(x, fc_w, fc_b, sp_w):
    """Pure-JAX reference matching the PyTorch module (NCHW)."""
    pool = jnp.mean(x, axis=(2, 3), keepdims=True)                        # (N,C,1,1)
    y = jnp.einsum('oc,ncij->noij', fc_w, pool) + fc_b.reshape(1, -1, 1, 1)
    x1 = x * jax.nn.sigmoid(y)
    cm = jnp.mean(x1, axis=1, keepdims=True)
    cx = jnp.max(x1, axis=1, keepdims=True)
    cat = jnp.concatenate([cm, cx], axis=1)
    conv = jax.lax.conv_general_dilated(
        cat, sp_w, window_strides=(1, 1), padding=((PAD, PAD), (PAD, PAD)),
        dimension_numbers=('NCHW', 'OIHW', 'NCHW'))
    return x1 * jax.nn.sigmoid(conv)


if __name__ == "__main__":
    N, C, H, W = 2, 4, 16, 16
    key = jax.random.PRNGKey(0)
    k1, k2, k3, k4 = jax.random.split(key, 4)

    x = jax.random.normal(k1, (N, C, H, W), jnp.float32)
    # Deterministic synthetic parameters (shapes from the module __init__).
    fc_w = jax.random.normal(k2, (C, C), jnp.float32) * 0.5       # Conv2d(C,C,1) weight
    fc_b = jax.random.normal(k3, (C,), jnp.float32) * 0.1         # Conv2d(C,C,1) bias
    sp_w = jax.random.normal(k4, (1, 2, KSIZE, KSIZE), jnp.float32) * 0.1  # Conv2d(2,1,7)

    out = cbam_forward(x, fc_w, fc_b, sp_w)
    out = jax.block_until_ready(out)

    ref = ref_cbam(x, fc_w, fc_b, sp_w)
    # Tolerance budget: the in-kernel spatial sigmoid uses the EUP's
    # approximate reciprocal (~2^-12 relative error on the gate); everything
    # else matches the reference far tighter than this.
    assert jnp.allclose(out, ref, atol=2e-3, rtol=2e-3), (
        "kernel/reference mismatch, max abs err = "
        f"{float(jnp.max(jnp.abs(out - ref)))}")
    print("KERNEL_OK")
</pallas_src>

<mosaic_0001>
module attributes {stable_mosaic.version = 11 : i64} {
  func.func @cbam_kernel(%arg0: i32, %arg1: memref<1x4x16x16xf32, #tpu.memory_space<vmem>>, %arg2: memref<1x4x1x16xf32, #tpu.memory_space<vmem>>, %arg3: memref<14x16x16xf32, #tpu.memory_space<vmem>>, %arg4: memref<1x4x16x16xf32, #tpu.memory_space<vmem>>, %arg5: memref<2x22x16xf32, #tpu.memory_space<vmem>>) attributes {dimension_semantics = [#tpu.dimension_semantics<parallel>], iteration_bounds = array<i64: 2>, scalar_prefetch = 0 : i64, scratch_operands = 1 : i64, tpu.core_type = #tpu.core_type<tc>, window_params = [{transform_indices = @transform_0, window_bounds = array<i64: 1, 4, 16, 16>}, {transform_indices = @transform_1, window_bounds = array<i64: 1, 4, 1, 16>}, {pipeline_mode = #tpu.pipeline_mode<synchronous>, transform_indices = @transform_2, window_bounds = array<i64: 14, 16, 16>}, {transform_indices = @transform_3, window_bounds = array<i64: 1, 4, 16, 16>}]} {
    %c0 = arith.constant 0 : index
    %c0_0 = arith.constant 0 : index
    %c0_1 = arith.constant 0 : index
    %c0_2 = arith.constant 0 : index
    %0 = vector.load %arg1[%c0, %c0_0, %c0_1, %c0_2] : memref<1x4x16x16xf32, #tpu.memory_space<vmem>>, vector<1x4x16x16xf32>
    %1 = vector.shape_cast %0 : vector<1x4x16x16xf32> to vector<4x16x16xf32>
    %c0_3 = arith.constant 0 : index
    %c0_4 = arith.constant 0 : index
    %c0_5 = arith.constant 0 : index
    %c0_6 = arith.constant 0 : index
    %2 = vector.load %arg2[%c0_3, %c0_4, %c0_5, %c0_6] : memref<1x4x1x16xf32, #tpu.memory_space<vmem>>, vector<1x4x1x16xf32>
    %3 = vector.shape_cast %2 : vector<1x4x1x16xf32> to vector<4x1x16xf32>
    %4 = vector.broadcast %3 : vector<4x1x16xf32> to vector<4x16x16xf32>
    %5 = arith.mulf %1, %4 : vector<4x16x16xf32>
    %cst = arith.constant dense<0.000000e+00> : vector<16x16xf32>
    %6 = vector.multi_reduction <add>, %5, %cst [0] : vector<4x16x16xf32> to vector<16x16xf32>
    %cst_7 = arith.constant 4.000000e+00 : f32
    %7 = vector.broadcast %cst_7 : f32 to vector<16x16xf32>
    %8 = arith.divf %6, %7 : vector<16x16xf32>
    %cst_8 = arith.constant dense<0xFF800000> : vector<16x16xf32>
    %9 = vector.multi_reduction <maximumf>, %5, %cst_8 [0] : vector<4x16x16xf32> to vector<16x16xf32>
    %cst_9 = arith.constant 0.000000e+00 : f32
    %10 = vector.broadcast %cst_9 : f32 to vector<3x16xf32>
    %c0_10 = arith.constant 0 : index
    %c0_11 = arith.constant 0 : index
    %c0_12 = arith.constant 0 : index
    %11 = vector.load %arg5[%c0_10, %c0_11, %c0_12] : memref<2x22x16xf32, #tpu.memory_space<vmem>>, vector<1x3x16xf32>
    %12 = vector.shape_cast %11 : vector<1x3x16xf32> to vector<3x16xf32>
    %13 = vector.shape_cast %10 : vector<3x16xf32> to vector<1x3x16xf32>
    tpu.vector_store %arg5[%c0_10, %c0_11, %c0_12], %13 {strides = array<i32>} : memref<2x22x16xf32, #tpu.memory_space<vmem>>, vector<1x3x16xf32>,
    %c0_13 = arith.constant 0 : index
    %c19 = arith.constant 19 : index
    %c0_14 = arith.constant 0 : index
    %14 = vector.load %arg5[%c0_13, %c19, %c0_14] : memref<2x22x16xf32, #tpu.memory_space<vmem>>, vector<1x3x16xf32>
    %15 = vector.shape_cast %14 : vector<1x3x16xf32> to vector<3x16xf32>
    %16 = vector.shape_cast %10 : vector<3x16xf32> to vector<1x3x16xf32>
    tpu.vector_store %arg5[%c0_13, %c19, %c0_14], %16 {strides = array<i32>} : memref<2x22x16xf32, #tpu.memory_space<vmem>>, vector<1x3x16xf32>,
    %c1 = arith.constant 1 : index
    %c0_15 = arith.constant 0 : index
    %c0_16 = arith.constant 0 : index
    %17 = vector.load %arg5[%c1, %c0_15, %c0_16] : memref<2x22x16xf32, #tpu.memory_space<vmem>>, vector<1x3x16xf32>
    %18 = vector.shape_cast %17 : vector<1x3x16xf32> to vector<3x16xf32>
    %19 = vector.shape_cast %10 : vector<3x16xf32> to vector<1x3x16xf32>
    tpu.vector_store %arg5[%c1, %c0_15, %c0_16], %19 {strides = array<i32>} : memref<2x22x16xf32, #tpu.memory_space<vmem>>, vector<1x3x16xf32>,
    %c1_17 = arith.constant 1 : index
    %c19_18 = arith.constant 19 : index
    %c0_19 = arith.constant 0 : index
    %20 = vector.load %arg5[%c1_17, %c19_18, %c0_19] : memref<2x22x16xf32, #tpu.memory_space<vmem>>, vector<1x3x16xf32>
    %21 = vector.shape_cast %20 : vector<1x3x16xf32> to vector<3x16xf32>
    %22 = vector.shape_cast %10 : vector<3x16xf32> to vector<1x3x16xf32>
    tpu.vector_store %arg5[%c1_17, %c19_18, %c0_19], %22 {strides = array<i32>} : memref<2x22x16xf32, #tpu.memory_space<vmem>>, vector<1x3x16xf32>,
    %c0_20 = arith.constant 0 : index
    %c3 = arith.constant 3 : index
    %c0_21 = arith.constant 0 : index
    %23 = vector.load %arg5[%c0_20, %c3, %c0_21] : memref<2x22x16xf32, #tpu.memory_space<vmem>>, vector<1x16x16xf32>
    %24 = vector.shape_cast %23 : vector<1x16x16xf32> to vector<16x16xf32>
    %25 = vector.shape_cast %8 : vector<16x16xf32> to vector<1x16x16xf32>
    tpu.vector_store %arg5[%c0_20, %c3, %c0_21], %25 {strides = array<i32>} : memref<2x22x16xf32, #tpu.memory_space<vmem>>, vector<1x16x16xf32>,
    %c1_22 = arith.constant 1 : index
    %c3_23 = arith.constant 3 : index
    %c0_24 = arith.constant 0 : index
    %26 = vector.load %arg5[%c1_22, %c3_23, %c0_24] : memref<2x22x16xf32, #tpu.memory_space<vmem>>, vector<1x16x16xf32>
    %27 = vector.shape_cast %26 : vector<1x16x16xf32> to vector<16x16xf32>
    %28 = vector.shape_cast %9 : vector<16x16xf32> to vector<1x16x16xf32>
    tpu.vector_store %arg5[%c1_22, %c3_23, %c0_24], %28 {strides = array<i32>} : memref<2x22x16xf32, #tpu.memory_space<vmem>>, vector<1x16x16xf32>,
    %cst_25 = arith.constant 0.000000e+00 : f32
    %29 = vector.broadcast %cst_25 : f32 to vector<16x16xf32>
    %c0_26 = arith.constant 0 : index
    %c0_27 = arith.constant 0 : index
    %c0_28 = arith.constant 0 : index
    %30 = vector.load %arg5[%c0_26, %c0_27, %c0_28] : memref<2x22x16xf32, #tpu.memory_space<vmem>>, vector<1x16x16xf32>
    %31 = vector.shape_cast %30 : vector<1x16x16xf32> to vector<16x16xf32>
    %c0_29 = arith.constant 0 : index
    %c0_30 = arith.constant 0 : index
    %c0_31 = arith.constant 0 : index
    %32 = vector.load %arg3[%c0_29, %c0_30, %c0_31] : memref<14x16x16xf32, #tpu.memory_space<vmem>>, vector<1x16x16xf32>
    %33 = vector.shape_cast %32 : vector<1x16x16xf32> to vector<16x16xf32>
    %cst_32 = arith.constant dense<0.000000e+00> : vector<16x16xf32>
    %34 = tpu.matmul %31, %33, %cst_32 {dimension_numbers = #tpu.dot_dimension_numbers<[1], [0], [0], [1], [0, 0, 1, 1], [], []>} : vector<16x16xf32>, vector<16x16xf32>, vector<16x16xf32> -> vector<16x16xf32>
    %35 = arith.addf %29, %34 : vector<16x16xf32>
    %c0_33 = arith.constant 0 : index
    %c1_34 = arith.constant 1 : index
    %c0_35 = arith.constant 0 : index
    %36 = vector.load %arg5[%c0_33, %c1_34, %c0_35] : memref<2x22x16xf32, #tpu.memory_space<vmem>>, vector<1x16x16xf32>
    %37 = vector.shape_cast %36 : vector<1x16x16xf32> to vector<16x16xf32>
    %c1_36 = arith.constant 1 : index
    %c0_37 = arith.constant 0 : index
    %c0_38 = arith.constant 0 : index
    %38 = vector.load %arg3[%c1_36, %c0_37, %c0_38] : memref<14x16x16xf32, #tpu.memory_space<vmem>>, vector<1x16x16xf32>
    %39 = vector.shape_cast %38 : vector<1x16x16xf32> to vector<16x16xf32>
    %cst_39 = arith.constant dense<0.000000e+00> : vector<16x16xf32>
    %40 = tpu.matmul %37, %39, %cst_39 {dimension_numbers = #tpu.dot_dimension_numbers<[1], [0], [0], [1], [0, 0, 1, 1], [], []>} : vector<16x16xf32>, vector<16x16xf32>, vector<16x16xf32> -> vector<16x16xf32>
    %41 = arith.addf %35, %40 : vector<16x16xf32>
    %c0_40 = arith.constant 0 : index
    %c2 = arith.constant 2 : index
    %c0_41 = arith.constant 0 : index
    %42 = vector.load %arg5[%c0_40, %c2, %c0_41] : memref<2x22x16xf32, #tpu.memory_space<vmem>>, vector<1x16x16xf32>
    %43 = vector.shape_cast %42 : vector<1x16x16xf32> to vector<16x16xf32>
    %c2_42 = arith.constant 2 : index
    %c0_43 = arith.constant 0 : index
    %c0_44 = arith.constant 0 : index
    %44 = vector.load %arg3[%c2_42, %c0_43, %c0_44] : memref<14x16x16xf32, #tpu.memory_space<vmem>>, vector<1x16x16xf32>
    %45 = vector.shape_cast %44 : vector<1x16x16xf32> to vector<16x16xf32>
    %cst_45 = arith.constant dense<0.000000e+00> : vector<16x16xf32>
    %46 = tpu.matmul %43, %45, %cst_45 {dimension_numbers = #tpu.dot_dimension_numbers<[1], [0], [0], [1], [0, 0, 1, 1], [], []>} : vector<16x16xf32>, vector<16x16xf32>, vector<16x16xf32> -> vector<16x16xf32>
    %47 = arith.addf %41, %46 : vector<16x16xf32>
    %c0_46 = arith.constant 0 : index
    %c3_47 = arith.constant 3 : index
    %c0_48 = arith.constant 0 : index
    %48 = vector.load %arg5[%c0_46, %c3_47, %c0_48] : memref<2x22x16xf32, #tpu.memory_space<vmem>>, vector<1x16x16xf32>
    %49 = vector.shape_cast %48 : vector<1x16x16xf32> to vector<16x16xf32>
    %c3_49 = arith.constant 3 : index
    %c0_50 = arith.constant 0 : index
    %c0_51 = arith.constant 0 : index
    %50 = vector.load %arg3[%c3_49, %c0_50, %c0_51] : memref<14x16x16xf32, #tpu.memory_space<vmem>>, vector<1x16x16xf32>
    %51 = vector.shape_cast %50 : vector<1x16x16xf32> to vector<16x16xf32>
    %cst_52 = arith.constant dense<0.000000e+00> : vector<16x16xf32>
    %52 = tpu.matmul %49, %51, %cst_52 {dimension_numbers = #tpu.dot_dimension_numbers<[1], [0], [0], [1], [0, 0, 1, 1], [], []>} : vector<16x16xf32>, vector<16x16xf32>, vector<16x16xf32> -> vector<16x16xf32>
    %53 = arith.addf %47, %52 : vector<16x16xf32>
    %c0_53 = arith.constant 0 : index
    %c4 = arith.constant 4 : index
    %c0_54 = arith.constant 0 : index
    %54 = vector.load %arg5[%c0_53, %c4, %c0_54] : memref<2x22x16xf32, #tpu.memory_space<vmem>>, vector<1x16x16xf32>
    %55 = vector.shape_cast %54 : vector<1x16x16xf32> to vector<16x16xf32>
    %c4_55 = arith.constant 4 : index
    %c0_56 = arith.constant 0 : index
    %c0_57 = arith.constant 0 : index
    %56 = vector.load %arg3[%c4_55, %c0_56, %c0_57] : memref<14x16x16xf32, #tpu.memory_space<vmem>>, vector<1x16x16xf32>
    %57 = vector.shape_cast %56 : vector<1x16x16xf32> to vector<16x16xf32>
    %cst_58 = arith.constant dense<0.000000e+00> : vector<16x16xf32>
    %58 = tpu.matmul %55, %57, %cst_58 {dimension_numbers = #tpu.dot_dimension_numbers<[1], [0], [0], [1], [0, 0, 1, 1], [], []>} : vector<16x16xf32>, vector<16x16xf32>, vector<16x16xf32> -> vector<16x16xf32>
    %59 = arith.addf %53, %58 : vector<16x16xf32>
    %c0_59 = arith.constant 0 : index
    %c5 = arith.constant 5 : index
    %c0_60 = arith.constant 0 : index
    %60 = vector.load %arg5[%c0_59, %c5, %c0_60] : memref<2x22x16xf32, #tpu.memory_space<vmem>>, vector<1x16x16xf32>
    %61 = vector.shape_cast %60 : vector<1x16x16xf32> to vector<16x16xf32>
    %c5_61 = arith.constant 5 : index
    %c0_62 = arith.constant 0 : index
    %c0_63 = arith.constant 0 : index
    %62 = vector.load %arg3[%c5_61, %c0_62, %c0_63] : memref<14x16x16xf32, #tpu.memory_space<vmem>>, vector<1x16x16xf32>
    %63 = vector.shape_cast %62 : vector<1x16x16xf32> to vector<16x16xf32>
    %cst_64 = arith.constant dense<0.000000e+00> : vector<16x16xf32>
    %64 = tpu.matmul %61, %63, %cst_64 {dimension_numbers = #tpu.dot_dimension_numbers<[1], [0], [0], [1], [0, 0, 1, 1], [], []>} : vector<16x16xf32>, vector<16x16xf32>, vector<16x16xf32> -> vector<16x16xf32>
    %65 = arith.addf %59, %64 : vector<16x16xf32>
    %c0_65 = arith.constant 0 : index
    %c6 = arith.constant 6 : index
    %c0_66 = arith.constant 0 : index
    %66 = vector.load %arg5[%c0_65, %c6, %c0_66] : memref<2x22x16xf32, #tpu.memory_space<vmem>>, vector<1x16x16xf32>
    %67 = vector.shape_cast %66 : vector<1x16x16xf32> to vector<16x16xf32>
    %c6_67 = arith.constant 6 : index
    %c0_68 = arith.constant 0 : index
    %c0_69 = arith.constant 0 : index
    %68 = vector.load %arg3[%c6_67, %c0_68, %c0_69] : memref<14x16x16xf32, #tpu.memory_space<vmem>>, vector<1x16x16xf32>
    %69 = vector.shape_cast %68 : vector<1x16x16xf32> to vector<16x16xf32>
    %cst_70 = arith.constant dense<0.000000e+00> : vector<16x16xf32>
    %70 = tpu.matmul %67, %69, %cst_70 {dimension_numbers = #tpu.dot_dimension_numbers<[1], [0], [0], [1], [0, 0, 1, 1], [], []>} : vector<16x16xf32>, vector<16x16xf32>, vector<16x16xf32> -> vector<16x16xf32>
    %71 = arith.addf %65, %70 : vector<16x16xf32>
    %c1_71 = arith.constant 1 : index
    %c0_72 = arith.constant 0 : index
    %c0_73 = arith.constant 0 : index
    %72 = vector.load %arg5[%c1_71, %c0_72, %c0_73] : memref<2x22x16xf32, #tpu.memory_space<vmem>>, vector<1x16x16xf32>
    %73 = vector.shape_cast %72 : vector<1x16x16xf32> to vector<16x16xf32>
    %c7 = arith.constant 7 : index
    %c0_74 = arith.constant 0 : index
    %c0_75 = arith.constant 0 : index
    %74 = vector.load %arg3[%c7, %c0_74, %c0_75] : memref<14x16x16xf32, #tpu.memory_space<vmem>>, vector<1x16x16xf32>
    %75 = vector.shape_cast %74 : vector<1x16x16xf32> to vector<16x16xf32>
    %cst_76 = arith.constant dense<0.000000e+00> : vector<16x16xf32>
    %76 = tpu.matmul %73, %75, %cst_76 {dimension_numbers = #tpu.dot_dimension_numbers<[1], [0], [0], [1], [0, 0, 1, 1], [], []>} : vector<16x16xf32>, vector<16x16xf32>, vector<16x16xf32> -> vector<16x16xf32>
    %77 = arith.addf %71, %76 : vector<16x16xf32>
    %c1_77 = arith.constant 1 : index
    %c1_78 = arith.constant 1 : index
    %c0_79 = arith.constant 0 : index
    %78 = vector.load %arg5[%c1_77, %c1_78, %c0_79] : memref<2x22x16xf32, #tpu.memory_space<vmem>>, vector<1x16x16xf32>
    %79 = vector.shape_cast %78 : vector<1x16x16xf32> to vector<16x16xf32>
    %c8 = arith.constant 8 : index
    %c0_80 = arith.constant 0 : index
    %c0_81 = arith.constant 0 : index
    %80 = vector.load %arg3[%c8, %c0_80, %c0_81] : memref<14x16x16xf32, #tpu.memory_space<vmem>>, vector<1x16x16xf32>
    %81 = vector.shape_cast %80 : vector<1x16x16xf32> to vector<16x16xf32>
    %cst_82 = arith.constant dense<0.000000e+00> : vector<16x16xf32>
    %82 = tpu.matmul %79, %81, %cst_82 {dimension_numbers = #tpu.dot_dimension_numbers<[1], [0], [0], [1], [0, 0, 1, 1], [], []>} : vector<16x16xf32>, vector<16x16xf32>, vector<16x16xf32> -> vector<16x16xf32>
    %83 = arith.addf %77, %82 : vector<16x16xf32>
    %c1_83 = arith.constant 1 : index
    %c2_84 = arith.constant 2 : index
    %c0_85 = arith.constant 0 : index
    %84 = vector.load %arg5[%c1_83, %c2_84, %c0_85] : memref<2x22x16xf32, #tpu.memory_space<vmem>>, vector<1x16x16xf32>
    %85 = vector.shape_cast %84 : vector<1x16x16xf32> to vector<16x16xf32>
    %c9 = arith.constant 9 : index
    %c0_86 = arith.constant 0 : index
    %c0_87 = arith.constant 0 : index
    %86 = vector.load %arg3[%c9, %c0_86, %c0_87] : memref<14x16x16xf32, #tpu.memory_space<vmem>>, vector<1x16x16xf32>
    %87 = vector.shape_cast %86 : vector<1x16x16xf32> to vector<16x16xf32>
    %cst_88 = arith.constant dense<0.000000e+00> : vector<16x16xf32>
    %88 = tpu.matmul %85, %87, %cst_88 {dimension_numbers = #tpu.dot_dimension_numbers<[1], [0], [0], [1], [0, 0, 1, 1], [], []>} : vector<16x16xf32>, vector<16x16xf32>, vector<16x16xf32> -> vector<16x16xf32>
    %89 = arith.addf %83, %88 : vector<16x16xf32>
    %c1_89 = arith.constant 1 : index
    %c3_90 = arith.constant 3 : index
    %c0_91 = arith.constant 0 : index
    %90 = vector.load %arg5[%c1_89, %c3_90, %c0_91] : memref<2x22x16xf32, #tpu.memory_space<vmem>>, vector<1x16x16xf32>
    %91 = vector.shape_cast %90 : vector<1x16x16xf32> to vector<16x16xf32>
    %c10 = arith.constant 10 : index
    %c0_92 = arith.constant 0 : index
    %c0_93 = arith.constant 0 : index
    %92 = vector.load %arg3[%c10, %c0_92, %c0_93] : memref<14x16x16xf32, #tpu.memory_space<vmem>>, vector<1x16x16xf32>
    %93 = vector.shape_cast %92 : vector<1x16x16xf32> to vector<16x16xf32>
    %cst_94 = arith.constant dense<0.000000e+00> : vector<16x16xf32>
    %94 = tpu.matmul %91, %93, %cst_94 {dimension_numbers = #tpu.dot_dimension_numbers<[1], [0], [0], [1], [0, 0, 1, 1], [], []>} : vector<16x16xf32>, vector<16x16xf32>, vector<16x16xf32> -> vector<16x16xf32>
    %95 = arith.addf %89, %94 : vector<16x16xf32>
    %c1_95 = arith.constant 1 : index
    %c4_96 = arith.constant 4 : index
    %c0_97 = arith.constant 0 : index
    %96 = vector.load %arg5[%c1_95, %c4_96, %c0_97] : memref<2x22x16xf32, #tpu.memory_space<vmem>>, vector<1x16x16xf32>
    %97 = vector.shape_cast %96 : vector<1x16x16xf32> to vector<16x16xf32>
    %c11 = arith.constant 11 : index
    %c0_98 = arith.constant 0 : index
    %c0_99 = arith.constant 0 : index
    %98 = vector.load %arg3[%c11, %c0_98, %c0_99] : memref<14x16x16xf32, #tpu.memory_space<vmem>>, vector<1x16x16xf32>
    %99 = vector.shape_cast %98 : vector<1x16x16xf32> to vector<16x16xf32>
    %cst_100 = arith.constant dense<0.000000e+00> : vector<16x16xf32>
    %100 = tpu.matmul %97, %99, %cst_100 {dimension_numbers = #tpu.dot_dimension_numbers<[1], [0], [0], [1], [0, 0, 1, 1], [], []>} : vector<16x16xf32>, vector<16x16xf32>, vector<16x16xf32> -> vector<16x16xf32>
    %101 = arith.addf %95, %100 : vector<16x16xf32>
    %c1_101 = arith.constant 1 : index
    %c5_102 = arith.constant 5 : index
    %c0_103 = arith.constant 0 : index
    %102 = vector.load %arg5[%c1_101, %c5_102, %c0_103] : memref<2x22x16xf32, #tpu.memory_space<vmem>>, vector<1x16x16xf32>
    %103 = vector.shape_cast %102 : vector<1x16x16xf32> to vector<16x16xf32>
    %c12 = arith.constant 12 : index
    %c0_104 = arith.constant 0 : index
    %c0_105 = arith.constant 0 : index
    %104 = vector.load %arg3[%c12, %c0_104, %c0_105] : memref<14x16x16xf32, #tpu.memory_space<vmem>>, vector<1x16x16xf32>
    %105 = vector.shape_cast %104 : vector<1x16x16xf32> to vector<16x16xf32>
    %cst_106 = arith.constant dense<0.000000e+00> : vector<16x16xf32>
    %106 = tpu.matmul %103, %105, %cst_106 {dimension_numbers = #tpu.dot_dimension_numbers<[1], [0], [0], [1], [0, 0, 1, 1], [], []>} : vector<16x16xf32>, vector<16x16xf32>, vector<16x16xf32> -> vector<16x16xf32>
    %107 = arith.addf %101, %106 : vector<16x16xf32>
    %c1_107 = arith.constant 1 : index
    %c6_108 = arith.constant 6 : index
    %c0_109 = arith.constant 0 : index
    %108 = vector.load %arg5[%c1_107, %c6_108, %c0_109] : memref<2x22x16xf32, #tpu.memory_space<vmem>>, vector<1x16x16xf32>
    %109 = vector.shape_cast %108 : vector<1x16x16xf32> to vector<16x16xf32>
    %c13 = arith.constant 13 : index
    %c0_110 = arith.constant 0 : index
    %c0_111 = arith.constant 0 : index
    %110 = vector.load %arg3[%c13, %c0_110, %c0_111] : memref<14x16x16xf32, #tpu.memory_space<vmem>>, vector<1x16x16xf32>
    %111 = vector.shape_cast %110 : vector<1x16x16xf32> to vector<16x16xf32>
    %cst_112 = arith.constant dense<0.000000e+00> : vector<16x16xf32>
    %112 = tpu.matmul %109, %111, %cst_112 {dimension_numbers = #tpu.dot_dimension_numbers<[1], [0], [0], [1], [0, 0, 1, 1], [], []>} : vector<16x16xf32>, vector<16x16xf32>, vector<16x16xf32> -> vector<16x16xf32>
    %113 = arith.addf %107, %112 : vector<16x16xf32>
    %cst_113 = arith.constant 0.000000e+00 : f32
    %114 = vector.broadcast %cst_113 : f32 to vector<16x16xf32>
    %115 = arith.subf %114, %113 : vector<16x16xf32>
    %116 = math.exp %115 : vector<16x16xf32>
    %cst_114 = arith.constant 1.000000e+00 : f32
    %117 = vector.broadcast %cst_114 : f32 to vector<16x16xf32>
    %118 = arith.addf %117, %116 : vector<16x16xf32>
    %119 = tpu.reciprocal %118 {approx = true} : vector<16x16xf32> -> vector<16x16xf32>
    %120 = vector.shape_cast %119 : vector<16x16xf32> to vector<1x16x16xf32>
    %121 = vector.broadcast %120 : vector<1x16x16xf32> to vector<4x16x16xf32>
    %122 = arith.mulf %5, %121 : vector<4x16x16xf32>
    %c0_115 = arith.constant 0 : index
    %c0_116 = arith.constant 0 : index
    %c0_117 = arith.constant 0 : index
    %c0_118 = arith.constant 0 : index
    %123 = vector.load %arg4[%c0_115, %c0_116, %c0_117, %c0_118] : memref<1x4x16x16xf32, #tpu.memory_space<vmem>>, vector<1x4x16x16xf32>
    %124 = vector.shape_cast %123 : vector<1x4x16x16xf32> to vector<4x16x16xf32>
    %125 = vector.shape_cast %122 : vector<4x16x16xf32> to vector<1x4x16x16xf32>
    tpu.vector_store %arg4[%c0_115, %c0_116, %c0_117, %c0_118], %125 {strides = array<i32>} : memref<1x4x16x16xf32, #tpu.memory_space<vmem>>, vector<1x4x16x16xf32>,
    return
  }
  func.func @transform_0(%arg0: i32) -> (i32, i32, i32, i32) {
    %c0_i32 = arith.constant 0 : i32
    %c0_i32_0 = arith.constant 0 : i32
    %c0_i32_1 = arith.constant 0 : i32
    %c0_i32_2 = arith.constant 0 : i32
    return %arg0, %c0_i32, %c0_i32_0, %c0_i32_1 : i32, i32, i32, i32
  }
  func.func @transform_1(%arg0: i32) -> (i32, i32, i32, i32) {
    %c0_i32 = arith.constant 0 : i32
    %c0_i32_0 = arith.constant 0 : i32
    %c0_i32_1 = arith.constant 0 : i32
    %c0_i32_2 = arith.constant 0 : i32
    return %arg0, %c0_i32, %c0_i32_0, %c0_i32_1 : i32, i32, i32, i32
  }
  func.func @transform_2(%arg0: i32) -> (i32, i32, i32) {
    %c0_i32 = arith.constant 0 : i32
    %c0_i32_0 = arith.constant 0 : i32
    %c0_i32_1 = arith.constant 0 : i32
    %c0_i32_2 = arith.constant 0 : i32
    return %c0_i32, %c0_i32_0, %c0_i32_1 : i32, i32, i32
  }
  func.func @transform_3(%arg0: i32) -> (i32, i32, i32, i32) {
    %c0_i32 = arith.constant 0 : i32
    %c0_i32_0 = arith.constant 0 : i32
    %c0_i32_1 = arith.constant 0 : i32
    %c0_i32_2 = arith.constant 0 : i32
    return %arg0, %c0_i32, %c0_i32_0, %c0_i32_1 : i32, i32, i32, i32
  }
}

</mosaic_0001>

<llo_original>
// kernel: cbam_forward.1
$region0: #{cbam_forward.1}
  #allocation0 [shape = 'u32[]', space=smem, size = 0x4, offset = 0x4, fixed_abs, tag = 'smem constant byte address 0x4 - core index']
  #allocation1 [shape = 'u32[144,128]{1,0:T(1,128)}', space=vmem, size = 0x12000, scoped, tag = 'internal scratch']
  #allocation2 [shape = 'f32[2,22,16]{2,1,0:T(8,128)}', space=vmem, size = 0x6000, scoped, tag = 'scratch operand']
  %s0 = inlined_call_operand.vmem [shape: f32[2,4,16,16], index: 0, kind: input, shape index: {}]
  %s1 = inlined_call_operand.vmem [shape: f32[2,4,1,16], index: 1, kind: input, shape index: {}]
  %s2 = inlined_call_operand.vmem [shape: f32[14,16,16], index: 2, kind: input, shape index: {}]
  %s3 = inlined_call_operand.hbm [shape: f32[2,4,16,16], index: 3, kind: output, shape index: {}]
  %s4 = sld [smem:[#allocation0]]
  $region45: #{cbam_forward.1} parent=0
    _
  %s6 = ssub.s32 1, %s4
  %s7 = scalar_select 0, %s6, %s4
  $region1: #{cbam_forward.1} parent=0
    #allocation3 [shape = 'u8[65536]{0}', space=vmem, size = 0x10000, scoped, tag = 'output window, operand 0']
    #allocation4 [shape = 's32[2]{0}', space=sflag, size = 0x8, scoped, tag = 'scoped memory for cbam_forward.1']
    %8 = vsyncpa [#allocation4], 0
    %s9 = scalar_lea.sflag [#allocation4], 1
    %10 = vsyncpa %s9, 0
    loop: start=0, step=1, limit=4
    $region2: #{cbam_forward.1} parent=1 // loop_pre_header
      _
    $region3: #{cbam_forward.1} parent=1 // loop_header
      %s12 = sphi 0, %s16
      %p13 = scmp.ge.s32.totalorder %s12, 4
      %s22 = sphi 0, %s24
      %s25 = sphi 0, %s22
      %s26 = sphi 0, %s25
      %s42 = sphi 0, %s26
      %s48 = sphi 0, %s50
      %s51 = sphi 0, %s48
      %s52 = sphi 0, %s51
      %s68 = sphi 0, %s52
      %s72 = sphi 0, %s72
      %s74 = sphi 0, %s72
      %s75 = sphi 0, %s74
      %s89 = sphi 0, %s75
      %s95 = sphi 0, %s97
      %s98 = sphi 0, %s95
      %s99 = sphi 0, %s98
      %s115 = sphi 0, %s99
    $region4: #{cbam_forward.1} parent=1 // loop_header_branch
      %15 = sbr.rel (%p13) target = $region8
    $region5: #{cbam_forward.1} parent=1 // loop_body
      %s17 = ssub.s32 %s12, 1
      %s18 = ssub.s32 %s12, 2
      %s19 = sadd.s32 %s12, 1
      %s20 = ssub.s32 %s12, %s19
      %p21 = scmp.eq.s32.totalorder %s20, 0
      %s23 = sadd.s32 %s22, 1
      %s24 = scalar_select %p21, %s22, %s23
      %p27 = pneg %p21
      %p28 = scmp.eq.s32.totalorder %s12, 1
      %p29 = por %p27, %p28
      %p30 = scmp.ne.s32.totalorder %s22, %s25
      %p31 = scmp.eq.s32.totalorder %s12, 0
      %p32 = por %p30, %p31
      %p33 = scmp.ne.s32.totalorder %s22, %s25
      %p34 = scmp.eq.s32.totalorder %s17, 1
      %p35 = por %p33, %p34
      %p36 = scmp.ne.s32.totalorder %s25, %s26
      %p37 = scmp.eq.s32.totalorder %s17, 0
      %p38 = por %p36, %p37
      %p39 = scmp.ne.s32.totalorder %s25, %s26
      %p40 = scmp.eq.s32.totalorder %s18, 1
      %p41 = por %p39, %p40
      %p43 = scmp.ne.s32.totalorder %s26, %s42
      %p44 = scmp.eq.s32.totalorder %s18, 0
      %p45 = por %p43, %p44
      %s46 = ssub.s32 %s12, %s19
      %p47 = scmp.eq.s32.totalorder %s46, 0
      %s49 = sadd.s32 %s48, 1
      %s50 = scalar_select %p47, %s48, %s49
      %p53 = pneg %p47
      %p54 = scmp.eq.s32.totalorder %s12, 1
      %p55 = por %p53, %p54
      %p56 = scmp.ne.s32.totalorder %s48, %s51
      %p57 = scmp.eq.s32.totalorder %s12, 0
      %p58 = por %p56, %p57
      %p59 = scmp.ne.s32.totalorder %s48, %s51
      %p60 = scmp.eq.s32.totalorder %s17, 1
      %p61 = por %p59, %p60
      %p62 = scmp.ne.s32.totalorder %s51, %s52
      %p63 = scmp.eq.s32.totalorder %s17, 0
      %p64 = por %p62, %p63
      %p65 = scmp.ne.s32.totalorder %s51, %s52
      %p66 = scmp.eq.s32.totalorder %s18, 1
      %p67 = por %p65, %p66
      %p69 = scmp.ne.s32.totalorder %s52, %s68
      %p70 = scmp.eq.s32.totalorder %s18, 0
      %p71 = por %p69, %p70
      %s73 = sadd.s32 %s72, 1
      %p76 = scmp.eq.s32.totalorder %s12, 1
      %p77 = scmp.ne.s32.totalorder %s72, %s74
      %p78 = scmp.eq.s32.totalorder %s12, 0
      %p79 = por %p77, %p78
      %p80 = scmp.ne.s32.totalorder %s72, %s74
      %p81 = scmp.eq.s32.totalorder %s17, 1
      %p82 = por %p80, %p81
      %p83 = scmp.ne.s32.totalorder %s74, %s75
      %p84 = scmp.eq.s32.totalorder %s17, 0
      %p85 = por %p83, %p84
      %p86 = scmp.ne.s32.totalorder %s74, %s75
      %p87 = scmp.eq.s32.totalorder %s18, 1
      %p88 = por %p86, %p87
      %p90 = scmp.ne.s32.totalorder %s75, %s89
      %p91 = scmp.eq.s32.totalorder %s18, 0
      %p92 = por %p90, %p91
      %s93 = ssub.s32 %s12, %s19
      %p94 = scmp.eq.s32.totalorder %s93, 0
      %s96 = sadd.s32 %s95, 1
      %s97 = scalar_select %p94, %s95, %s96
      %p100 = pneg %p94
      %p101 = scmp.eq.s32.totalorder %s12, 1
      %p102 = por %p100, %p101
      %p103 = scmp.ne.s32.totalorder %s95, %s98
      %p104 = scmp.eq.s32.totalorder %s12, 0
      %p105 = por %p103, %p104
      %p106 = scmp.ne.s32.totalorder %s95, %s98
      %p107 = scmp.eq.s32.totalorder %s17, 1
      %p108 = por %p106, %p107
      %p109 = scmp.ne.s32.totalorder %s98, %s99
      %p110 = scmp.eq.s32.totalorder %s17, 0
      %p111 = por %p109, %p110
      %p112 = scmp.ne.s32.totalorder %s98, %s99
      %p113 = scmp.eq.s32.totalorder %s18, 1
      %p114 = por %p112, %p113
      %p116 = scmp.ne.s32.totalorder %s99, %s115
      %p117 = scmp.eq.s32.totalorder %s18, 0
      %p118 = por %p116, %p117
      %p119 = scmp.le.s32.totalorder 1, %s12
      %p120 = scmp.lt.s32.totalorder %s12, 3
      %p121 = pnand %p119, %p120
      %p122 = pneg %p121
      // Predicated region
      $region9: #{cbam_forward.1} parent=5 // pred_check
        _
      $region10: #{cbam_forward.1} parent=5 // pred_check_branch
        %124 = sbr.rel (%p121) target = $region12
      $region11: #{cbam_forward.1} parent=5 // pred_region
        %s125 = ssub.s32 %s12, 1
        // Predicated region
        $region13: #{cbam_forward.1} parent=11 // pred_check
          %p126 = pneg %p85
        $region14: #{cbam_forward.1} parent=11 // pred_check_branch
          %128 = sbr.rel (%p126) target = $region16
        $region15: #{cbam_forward.1} parent=11 // pred_region
          _
        $region16: #{cbam_forward.1} parent=11 // pred_fallthru
          _
      $region12: #{cbam_forward.1} parent=5 // pred_fallthru
        _
      %p129 = scmp.lt.s32.totalorder %s12, 2
      // Predicated region
      $region17: #{cbam_forward.1} parent=5 // pred_check
        %p130 = pneg %p129
      $region18: #{cbam_forward.1} parent=5 // pred_check_branch
        %132 = sbr.rel (%p130) target = $region20
      $region19: #{cbam_forward.1} parent=5 // pred_region
        // Predicated region
        $region21: #{cbam_forward.1} parent=19 // pred_check
          %p133 = pneg %p32
        $region22: #{cbam_forward.1} parent=19 // pred_check_branch
          %135 = sbr.rel (%p133) target = $region24
        $region23: #{cbam_forward.1} parent=19 // pred_region
          %p136 = scmp.lt.s32.totalorder %s12, 1
          %s137 = scalar_select %p136, %s12, 1
          %s138 = smul.addr %s137, 8
          %s139 = smul.addr %s138, 8
          %s140 = scalar_lea.vmem %s0, %s139
        $region24: #{cbam_forward.1} parent=19 // pred_fallthru
          _
        // Predicated region
        $region25: #{cbam_forward.1} parent=19 // pred_check
          %p141 = pneg %p58
        $region26: #{cbam_forward.1} parent=19 // pred_check_branch
          %143 = sbr.rel (%p141) target = $region28
        $region27: #{cbam_forward.1} parent=19 // pred_region
          %p144 = scmp.lt.s32.totalorder %s12, 1
          %s145 = scalar_select %p144, %s12, 1
          %s146 = smul.addr %s145, 4
          %s147 = scalar_lea.vmem %s1, %s146
        $region28: #{cbam_forward.1} parent=19 // pred_fallthru
          _
      $region20: #{cbam_forward.1} parent=5 // pred_fallthru
        _
      %p148 = scmp.le.s32.totalorder 1, %s12
      %p149 = scmp.lt.s32.totalorder %s12, 3
      %p150 = pnand %p148, %p149
      %p151 = pneg %p150
      // Predicated region
      $region29: #{cbam_forward.1} parent=5 // pred_check
        _
      $region30: #{cbam_forward.1} parent=5 // pred_check_branch
        %153 = sbr.rel (%p150) target = $region32
      $region31: #{cbam_forward.1} parent=5 // pred_region
        %s154 = ssub.s32 %s12, 1
        %p155 = scmp.lt.s32.totalorder %s17, 1
        %s156 = scalar_select %p155, %s17, 1
        %s157 = smul.addr %s156, 8
        %s158 = smul.addr %s157, 8
        %s159 = scalar_lea.vmem %s0, %s158
        %p160 = pneg %p38
        %p161 = pneg %p35
        %p162 = scmp.lt.s32.totalorder %s17, 1
        %s163 = scalar_select %p162, %s17, 1
        %s164 = smul.addr %s163, 4
        %s165 = scalar_lea.vmem %s1, %s164
        %p166 = pneg %p64
        %p167 = pneg %p61
        %p168 = pneg %p85
        %p169 = pneg %p82
        %p170 = pneg %p111
        %p171 = pneg %p108
        %s172 = sand.u32 %s98, 1
        %s173 = scalar_lea.sflag [#allocation4], %s172
        %s174 = sand.u32 %s98, 1
        %s175 = smul.addr %s174, 64
        %s176 = scalar_lea.vmem [#allocation3], %s175
        %p177 = scmp.lt.s32.totalorder %s17, 1
        %s178 = scalar_select %p177, %s17, 1
        %s179 = smul.addr %s178, 8
        %s180 = smul.addr %s179, 8
        %s181 = scalar_lea.vmem %s0, %s180
        %p182 = scmp.lt.s32.totalorder %s17, 1
        %s183 = scalar_select %p182, %s17, 1
        %s184 = smul.addr %s183, 4
        %s185 = scalar_lea.vmem %s1, %s184
        %v186 = vld [vmem:[%s181] sm:$0xff]
        %v187 = vld [vmem:[%s181 + $0x8] sm:$0xff]
        %v188 = vld [vmem:[%s181 + $0x10] sm:$0xff]
        %v189 = vld [vmem:[%s181 + $0x18] sm:$0xff]
        %v190 = vld [vmem:[%s181 + $0x20] sm:$0xff]
        %v191 = vld [vmem:[%s181 + $0x28] sm:$0xff]
        %v192 = vld [vmem:[%s181 + $0x30] sm:$0xff]
        %v193 = vld [vmem:[%s181 + $0x38] sm:$0xff]
        %v194 = vld [vmem:[%s185] sm:$0x1]
        %v195 = vld [vmem:[%s185 + $0x1] sm:$0x1]
        %v196 = vld [vmem:[%s185 + $0x2] sm:$0x1]
        %v197 = vld [vmem:[%s185 + $0x3] sm:$0x1]
        %v202 = vlaneseq
        %v203 = vshrl.u32 %v202, 7
        %v204 = vsub.s32 0, %v203
        %v205 = vrot.slane %v194, %v204
        %v206 = vlaneseq
        %v207 = vshrl.u32 %v206, 7
        %v208 = vsub.s32 0, %v207
        %v209 = vrot.slane %v195, %v208
        %v210 = vlaneseq
        %v211 = vshrl.u32 %v210, 7
        %v212 = vsub.s32 0, %v211
        %v213 = vrot.slane %v196, %v212
        %v214 = vlaneseq
        %v215 = vshrl.u32 %v214, 7
        %v216 = vsub.s32 0, %v215
        %v217 = vrot.slane %v197, %v216
        %v222 = vmul.f32 %v186, %v205
        %v223 = vmul.f32 %v187, %v205
        %v224 = vmul.f32 %v188, %v209
        %v225 = vmul.f32 %v189, %v209
        %v226 = vmul.f32 %v190, %v213
        %v227 = vmul.f32 %v191, %v213
        %v228 = vmul.f32 %v192, %v217
        %v229 = vmul.f32 %v193, %v217
        %vm230 = vcmask 130048
        %v231 = vsel %vm230, %v222, 0.0
        %v232 = vsel %vm230, %v224, 0.0
        %v233 = vadd.f32 %v231, %v232
        %v234 = vsel %vm230, %v226, 0.0
        %v235 = vadd.f32 %v233, %v234
        %v236 = vsel %vm230, %v228, 0.0
        %v237 = vadd.f32 %v235, %v236
        %v238 = vsel %vm230, %v223, 0.0
        %v239 = vsel %vm230, %v225, 0.0
        %v240 = vadd.f32 %v238, %v239
        %v241 = vsel %vm230, %v227, 0.0
        %v242 = vadd.f32 %v240, %v241
        %v243 = vsel %vm230, %v229, 0.0
        %v244 = vadd.f32 %v242, %v243
        %v245 = vrcp.pop 4.0
        %v246 = vmul.f32 %v237, %v245
        %v247 = vmul.f32 %v244, %v245
        %v248 = vsel %vm230, %v222, -inf
        %v249 = vsel %vm230, %v224, -inf
        %v250 = vsel %vm230, %v226, -inf
        %v251 = vmax.f32 %v248, %v250
        %v252 = vsel %vm230, %v228, -inf
        %v253 = vmax.f32 %v249, %v252
        %v254 = vmax.f32 %v251, %v253
        %v255 = vsel %vm230, %v223, -inf
        %v256 = vsel %vm230, %v225, -inf
        %v257 = vsel %vm230, %v227, -inf
        %v258 = vmax.f32 %v255, %v257
        %v259 = vsel %vm230, %v229, -inf
        %v260 = vmax.f32 %v256, %v259
        %v261 = vmax.f32 %v258, %v260
        %vm262 = vcmask 124928
        %263 = vst.msk [vmem:[#allocation2] sm:$0x7] %vm262, 0.0
        %264 = vst.msk [vmem:[#allocation2 + $0x13] sm:$0x7] %vm262, 0.0
        %s265 = scalar_lea.vmem [#allocation2], 24
        %266 = vst.msk [vmem:[%s265] sm:$0x7] %vm262, 0.0
        %267 = vst.msk [vmem:[%s265 + $0x13] sm:$0x7] %vm262, 0.0
        %268 = vst.msk [vmem:[#allocation2 + $0x3] sm:$0xff] %vm230, %v246
        %269 = vst.msk [vmem:[#allocation2 + $0xb] sm:$0xff] %vm230, %v247
        %270 = vst.msk [vmem:[%s265 + $0x3] sm:$0xff] %vm230, %v254
        %271 = vst.msk [vmem:[%s265 + $0xb] sm:$0xff] %vm230, %v261
        %v272 = vld [vmem:[#allocation2] sm:$0xff]
        %v273 = vld [vmem:[#allocation2 + $0x8] sm:$0xff]
        %v274 = vld [vmem:[%s2] sm:$0xff]
        %v275 = vld [vmem:[%s2 + $0x8] sm:$0xff]
        %v276 = vld [vmem:[#allocation2 + $0x1] sm:$0xff]
        %v277 = vld [vmem:[#allocation2 + $0x9] sm:$0xff]
        %s278 = scalar_lea.vmem %s2, 16
        %v279 = vld [vmem:[%s278] sm:$0xff]
        %v280 = vld [vmem:[%s278 + $0x8] sm:$0xff]
        %v282 = vsel %vm230, %v276, 0
        %v285 = vsel %vm230, %v277, 0
        %287 = vmatprep.subr.mxu0 0.0
        %288 = vmatpush1.msra.mxu0 %v279
        %289 = vmatprep.subr.mxu0 0.0
        %290 = vmatpush1.msra.mxu0 %v280
        %291 = vmatprep.subr.mxu0 0.0
        %292 = vmatpush1.msra.mxu0 0.0
        %293 = vmatprep.subr.mxu0 0.0
        %294 = vmatpush1.msra.mxu0 0.0
        %295 = vmatprep.subr.mxu0 0.0
        %296 = vmatpush1.msra.mxu0 0.0
        %297 = vmatprep.subr.mxu0 0.0
        %298 = vmatpush1.msra.mxu0 0.0
        %299 = vmatprep.subr.mxu0 0.0
        %300 = vmatpush1.msra.mxu0 0.0
        %301 = vmatprep.subr.mxu0 0.0
        %302 = vmatpush1.msra.mxu0 0.0
        %303 = vmatprep.subr.mxu0 0.0
        %304 = vmatpush1.msra.mxu0 0.0
        %305 = vmatprep.subr.mxu0 0.0
        %306 = vmatpush1.msra.mxu0 0.0
        %307 = vmatprep.subr.mxu0 0.0
        %308 = vmatpush1.msra.mxu0 0.0
        %309 = vmatprep.subr.mxu0 0.0
        %310 = vmatpush1.msra.mxu0 0.0
        %311 = vmatprep.subr.mxu0 0.0
        %312 = vmatpush1.msra.mxu0 0.0
        %313 = vmatprep.subr.mxu0 0.0
        %314 = vmatpush1.msra.mxu0 0.0
        %315 = vmatprep.subr.mxu0 0.0
        %316 = vmatpush1.msra.mxu0 0.0
        %317 = vmatprep.subr.mxu0 0.0
        %318 = vmatpush1.msra.mxu0 0.0
        %319 = vmatprep.subr.mxu0 0.0
        %320 = vmatpush1.msra.mxu0 0.0
        %321 = vmatprep.subr.mxu0 0.0
        %322 = vmatpush1.msra.mxu0 0.0
        %323 = vmatprep.subr.mxu0 0.0
        %324 = vmatpush1.msra.mxu0 0.0
        %325 = vmatprep.subr.mxu0 0.0
        %326 = vmatpush1.msra.mxu0 0.0
        %327 = vmatprep.subr.mxu0 0.0
        %328 = vmatpush1.msra.mxu0 0.0
        %329 = vmatprep.subr.mxu0 0.0
        %330 = vmatpush1.msra.mxu0 0.0
        %331 = vmatprep.subr.mxu0 0.0
        %332 = vmatpush1.msra.mxu0 0.0
        %333 = vmatprep.subr.mxu0 0.0
        %334 = vmatpush1.msra.mxu0 0.0
        %335 = vmatprep.subr.mxu0 0.0
        %336 = vmatpush1.msra.mxu0 0.0
        %337 = vmatprep.subr.mxu0 0.0
        %338 = vmatpush1.msra.mxu0 0.0
        %339 = vmatprep.subr.mxu0 0.0
        %340 = vmatpush1.msra.mxu0 0.0
        %341 = vmatprep.subr.mxu0 0.0
        %342 = vmatpush1.msra.mxu0 0.0
        %343 = vmatprep.subr.mxu0 0.0
        %344 = vmatpush1.msra.mxu0 0.0
        %345 = vmatprep.subr.mxu0 0.0
        %346 = vmatpush1.msra.mxu0 0.0
        %347 = vmatprep.subr.mxu0 0.0
        %348 = vmatpush1.msra.mxu0 0.0
        %349 = vmatprep.subr.mxu0 0.0
        %350 = vmatpush1.msra.mxu0 0.0
        %351 = vmatprep.mubr.f32.mxu0 0.0
        %352 = vmatmul.mubr.f32.gmra.mrb[0].mxu0 %v282
        %v353 = vpop.f32.mrb[0].mxu0
        %v354 = vadd.f32 0.0, %v353
        %v355 = vpop.f32.mrb[0].mxu0
        %356 = vmatprep.mubr.f32.mxu0 0.0
        %357 = vmatmul.mubr.f32.gmra.mrb[0].mxu0 %v285
        %v358 = vpop.f32.mrb[0].mxu0
        %v359 = vadd.f32 0.0, %v358
        %v360 = vpop.f32.mrb[0].mxu0
        %361 = vdwg.mxu0
        %v363 = vsel %vm230, %v272, 0
        %v366 = vsel %vm230, %v273, 0
        %368 = vmatprep.subr.mxu0 0.0
        %369 = vmatpush1.msra.mxu0 %v274
        %370 = vmatprep.subr.mxu0 0.0
        %371 = vmatpush1.msra.mxu0 %v275
        %372 = vmatprep.subr.mxu0 0.0
        %373 = vmatpush1.msra.mxu0 0.0
        %374 = vmatprep.subr.mxu0 0.0
        %375 = vmatpush1.msra.mxu0 0.0
        %376 = vmatprep.subr.mxu0 0.0
        %377 = vmatpush1.msra.mxu0 0.0
        %378 = vmatprep.subr.mxu0 0.0
        %379 = vmatpush1.msra.mxu0 0.0
        %380 = vmatprep.subr.mxu0 0.0
        %381 = vmatpush1.msra.mxu0 0.0
        %382 = vmatprep.subr.mxu0 0.0
        %383 = vmatpush1.msra.mxu0 0.0
        %384 = vmatprep.subr.mxu0 0.0
        %385 = vmatpush1.msra.mxu0 0.0
        %386 = vmatprep.subr.mxu0 0.0
        %387 = vmatpush1.msra.mxu0 0.0
        %388 = vmatprep.subr.mxu0 0.0
        %389 = vmatpush1.msra.mxu0 0.0
        %390 = vmatprep.subr.mxu0 0.0
        %391 = vmatpush1.msra.mxu0 0.0
        %392 = vmatprep.subr.mxu0 0.0
        %393 = vmatpush1.msra.mxu0 0.0
        %394 = vmatprep.subr.mxu0 0.0
        %395 = vmatpush1.msra.mxu0 0.0
        %396 = vmatprep.subr.mxu0 0.0
        %397 = vmatpush1.msra.mxu0 0.0
        %398 = vmatprep.subr.mxu0 0.0
        %399 = vmatpush1.msra.mxu0 0.0
        %400 = vmatprep.subr.mxu0 0.0
        %401 = vmatpush1.msra.mxu0 0.0
        %402 = vmatprep.subr.mxu0 0.0
        %403 = vmatpush1.msra.mxu0 0.0
        %404 = vmatprep.subr.mxu0 0.0
        %405 = vmatpush1.msra.mxu0 0.0
        %406 = vmatprep.subr.mxu0 0.0
        %407 = vmatpush1.msra.mxu0 0.0
        %408 = vmatprep.subr.mxu0 0.0
        %409 = vmatpush1.msra.mxu0 0.0
        %410 = vmatprep.subr.mxu0 0.0
        %411 = vmatpush1.msra.mxu0 0.0
        %412 = vmatprep.subr.mxu0 0.0
        %413 = vmatpush1.msra.mxu0 0.0
        %414 = vmatprep.subr.mxu0 0.0
        %415 = vmatpush1.msra.mxu0 0.0
        %416 = vmatprep.subr.mxu0 0.0
        %417 = vmatpush1.msra.mxu0 0.0
        %418 = vmatprep.subr.mxu0 0.0
        %419 = vmatpush1.msra.mxu0 0.0
        %420 = vmatprep.subr.mxu0 0.0
        %421 = vmatpush1.msra.mxu0 0.0
        %422 = vmatprep.subr.mxu0 0.0
        %423 = vmatpush1.msra.mxu0 0.0
        %424 = vmatprep.subr.mxu0 0.0
        %425 = vmatpush1.msra.mxu0 0.0
        %426 = vmatprep.subr.mxu0 0.0
        %427 = vmatpush1.msra.mxu0 0.0
        %428 = vmatprep.subr.mxu0 0.0
        %429 = vmatpush1.msra.mxu0 0.0
        %430 = vmatprep.subr.mxu0 0.0
        %431 = vmatpush1.msra.mxu0 0.0
        %432 = vmatprep.mubr.f32.mxu0 0.0
        %433 = vmatmul.mubr.f32.gmra.mrb[0].mxu0 %v363
        %v434 = vpop.f32.mrb[0].mxu0
        %v435 = vadd.f32 %v354, %v434
        %v436 = vpop.f32.mrb[0].mxu0
        %437 = vmatprep.mubr.f32.mxu0 0.0
        %438 = vmatmul.mubr.f32.gmra.mrb[0].mxu0 %v366
        %v439 = vpop.f32.mrb[0].mxu0
        %v440 = vadd.f32 %v359, %v439
        %v441 = vpop.f32.mrb[0].mxu0
        %442 = vdwg.mxu0
        %v443 = vld [vmem:[#allocation2 + $0x2] sm:$0xff]
        %v444 = vld [vmem:[#allocation2 + $0xa] sm:$0xff]
        %s445 = scalar_lea.vmem %s2, 32
        %v446 = vld [vmem:[%s445] sm:$0xff]
        %v447 = vld [vmem:[%s445 + $0x8] sm:$0xff]
        %v449 = vsel %vm230, %v443, 0
        %v452 = vsel %vm230, %v444, 0
        %454 = vmatprep.subr.mxu0 0.0
        %455 = vmatpush1.msra.mxu0 %v446
        %456 = vmatprep.subr.mxu0 0.0
        %457 = vmatpush1.msra.mxu0 %v447
        %458 = vmatprep.subr.mxu0 0.0
        %459 = vmatpush1.msra.mxu0 0.0
        %460 = vmatprep.subr.mxu0 0.0
        %461 = vmatpush1.msra.mxu0 0.0
        %462 = vmatprep.subr.mxu0 0.0
        %463 = vmatpush1.msra.mxu0 0.0
        %464 = vmatprep.subr.mxu0 0.0
        %465 = vmatpush1.msra.mxu0 0.0
        %466 = vmatprep.subr.mxu0 0.0
        %467 = vmatpush1.msra.mxu0 0.0
        %468 = vmatprep.subr.mxu0 0.0
        %469 = vmatpush1.msra.mxu0 0.0
        %470 = vmatprep.subr.mxu0 0.0
        %471 = vmatpush1.msra.mxu0 0.0
        %472 = vmatprep.subr.mxu0 0.0
        %473 = vmatpush1.msra.mxu0 0.0
        %474 = vmatprep.subr.mxu0 0.0
        %475 = vmatpush1.msra.mxu0 0.0
        %476 = vmatprep.subr.mxu0 0.0
        %477 = vmatpush1.msra.mxu0 0.0
        %478 = vmatprep.subr.mxu0 0.0
        %479 = vmatpush1.msra.mxu0 0.0
        %480 = vmatprep.subr.mxu0 0.0
        %481 = vmatpush1.msra.mxu0 0.0
        %482 = vmatprep.subr.mxu0 0.0
        %483 = vmatpush1.msra.mxu0 0.0
        %484 = vmatprep.subr.mxu0 0.0
        %485 = vmatpush1.msra.mxu0 0.0
        %486 = vmatprep.subr.mxu0 0.0
        %487 = vmatpush1.msra.mxu0 0.0
        %488 = vmatprep.subr.mxu0 0.0
        %489 = vmatpush1.msra.mxu0 0.0
        %490 = vmatprep.subr.mxu0 0.0
        %491 = vmatpush1.msra.mxu0 0.0
        %492 = vmatprep.subr.mxu0 0.0
        %493 = vmatpush1.msra.mxu0 0.0
        %494 = vmatprep.subr.mxu0 0.0
        %495 = vmatpush1.msra.mxu0 0.0
        %496 = vmatprep.subr.mxu0 0.0
        %497 = vmatpush1.msra.mxu0 0.0
        %498 = vmatprep.subr.mxu0 0.0
        %499 = vmatpush1.msra.mxu0 0.0
        %500 = vmatprep.subr.mxu0 0.0
        %501 = vmatpush1.msra.mxu0 0.0
        %502 = vmatprep.subr.mxu0 0.0
        %503 = vmatpush1.msra.mxu0 0.0
        %504 = vmatprep.subr.mxu0 0.0
        %505 = vmatpush1.msra.mxu0 0.0
        %506 = vmatprep.subr.mxu0 0.0
        %507 = vmatpush1.msra.mxu0 0.0
        %508 = vmatprep.subr.mxu0 0.0
        %509 = vmatpush1.msra.mxu0 0.0
        %510 = vmatprep.subr.mxu0 0.0
        %511 = vmatpush1.msra.mxu0 0.0
        %512 = vmatprep.subr.mxu0 0.0
        %513 = vmatpush1.msra.mxu0 0.0
        %514 = vmatprep.subr.mxu0 0.0
        %515 = vmatpush1.msra.mxu0 0.0
        %516 = vmatprep.subr.mxu0 0.0
        %517 = vmatpush1.msra.mxu0 0.0
        %518 = vmatprep.mubr.f32.mxu0 0.0
        %519 = vmatmul.mubr.f32.gmra.mrb[0].mxu0 %v449
        %v520 = vpop.f32.mrb[0].mxu0
        %v521 = vadd.f32 0.0, %v520
        %v522 = vpop.f32.mrb[0].mxu0
        %523 = vmatprep.mubr.f32.mxu0 0.0
        %524 = vmatmul.mubr.f32.gmra.mrb[0].mxu0 %v452
        %v525 = vpop.f32.mrb[0].mxu0
        %v526 = vadd.f32 0.0, %v525
        %v527 = vpop.f32.mrb[0].mxu0
        %528 = vdwg.mxu0
        %v529 = vadd.f32 %v435, %v521
        %v530 = vadd.f32 %v440, %v526
        %v531 = vld [vmem:[#allocation2 + $0x3] sm:$0xff]
        %v532 = vld [vmem:[#allocation2 + $0xb] sm:$0xff]
        %s533 = scalar_lea.vmem %s2, 48
        %v534 = vld [vmem:[%s533] sm:$0xff]
        %v535 = vld [vmem:[%s533 + $0x8] sm:$0xff]
        %v537 = vsel %vm230, %v531, 0
        %v540 = vsel %vm230, %v532, 0
        %542 = vmatprep.subr.mxu0 0.0
        %543 = vmatpush1.msra.mxu0 %v534
        %544 = vmatprep.subr.mxu0 0.0
        %545 = vmatpush1.msra.mxu0 %v535
        %546 = vmatprep.subr.mxu0 0.0
        %547 = vmatpush1.msra.mxu0 0.0
        %548 = vmatprep.subr.mxu0 0.0
        %549 = vmatpush1.msra.mxu0 0.0
        %550 = vmatprep.subr.mxu0 0.0
        %551 = vmatpush1.msra.mxu0 0.0
        %552 = vmatprep.subr.mxu0 0.0
        %553 = vmatpush1.msra.mxu0 0.0
        %554 = vmatprep.subr.mxu0 0.0
        %555 = vmatpush1.msra.mxu0 0.0
        %556 = vmatprep.subr.mxu0 0.0
        %557 = vmatpush1.msra.mxu0 0.0
        %558 = vmatprep.subr.mxu0 0.0
        %559 = vmatpush1.msra.mxu0 0.0
        %560 = vmatprep.subr.mxu0 0.0
        %561 = vmatpush1.msra.mxu0 0.0
        %562 = vmatprep.subr.mxu0 0.0
        %563 = vmatpush1.msra.mxu0 0.0
        %564 = vmatprep.subr.mxu0 0.0
        %565 = vmatpush1.msra.mxu0 0.0
        %566 = vmatprep.subr.mxu0 0.0
        %567 = vmatpush1.msra.mxu0 0.0
        %568 = vmatprep.subr.mxu0 0.0
        %569 = vmatpush1.msra.mxu0 0.0
        %570 = vmatprep.subr.mxu0 0.0
        %571 = vmatpush1.msra.mxu0 0.0
        %572 = vmatprep.subr.mxu0 0.0
        %573 = vmatpush1.msra.mxu0 0.0
        %574 = vmatprep.subr.mxu0 0.0
        %575 = vmatpush1.msra.mxu0 0.0
        %576 = vmatprep.subr.mxu0 0.0
        %577 = vmatpush1.msra.mxu0 0.0
        %578 = vmatprep.subr.mxu0 0.0
        %579 = vmatpush1.msra.mxu0 0.0
        %580 = vmatprep.subr.mxu0 0.0
        %581 = vmatpush1.msra.mxu0 0.0
        %582 = vmatprep.subr.mxu0 0.0
        %583 = vmatpush1.msra.mxu0 0.0
        %584 = vmatprep.subr.mxu0 0.0
        %585 = vmatpush1.msra.mxu0 0.0
        %586 = vmatprep.subr.mxu0 0.0
        %587 = vmatpush1.msra.mxu0 0.0
        %588 = vmatprep.subr.mxu0 0.0
        %589 = vmatpush1.msra.mxu0 0.0
        %590 = vmatprep.subr.mxu0 0.0
        %591 = vmatpush1.msra.mxu0 0.0
        %592 = vmatprep.subr.mxu0 0.0
        %593 = vmatpush1.msra.mxu0 0.0
        %594 = vmatprep.subr.mxu0 0.0
        %595 = vmatpush1.msra.mxu0 0.0
        %596 = vmatprep.subr.mxu0 0.0
        %597 = vmatpush1.msra.mxu0 0.0
        %598 = vmatprep.subr.mxu0 0.0
        %599 = vmatpush1.msra.mxu0 0.0
        %600 = vmatprep.subr.mxu0 0.0
        %601 = vmatpush1.msra.mxu0 0.0
        %602 = vmatprep.subr.mxu0 0.0
        %603 = vmatpush1.msra.mxu0 0.0
        %604 = vmatprep.subr.mxu0 0.0
        %605 = vmatpush1.msra.mxu0 0.0
        %606 = vmatprep.mubr.f32.mxu0 0.0
        %607 = vmatmul.mubr.f32.gmra.mrb[0].mxu0 %v537
        %v608 = vpop.f32.mrb[0].mxu0
        %v609 = vadd.f32 0.0, %v608
        %v610 = vpop.f32.mrb[0].mxu0
        %611 = vmatprep.mubr.f32.mxu0 0.0
        %612 = vmatmul.mubr.f32.gmra.mrb[0].mxu0 %v540
        %v613 = vpop.f32.mrb[0].mxu0
        %v614 = vadd.f32 0.0, %v613
        %v615 = vpop.f32.mrb[0].mxu0
        %616 = vdwg.mxu0
        %v617 = vadd.f32 %v529, %v609
        %v618 = vadd.f32 %v530, %v614
        %v619 = vld [vmem:[#allocation2 + $0x4] sm:$0xff]
        %v620 = vld [vmem:[#allocation2 + $0xc] sm:$0xff]
        %s621 = scalar_lea.vmem %s2, 64
        %v622 = vld [vmem:[%s621] sm:$0xff]
        %v623 = vld [vmem:[%s621 + $0x8] sm:$0xff]
        %v625 = vsel %vm230, %v619, 0
        %v628 = vsel %vm230, %v620, 0
        %630 = vmatprep.subr.mxu0 0.0
        %631 = vmatpush1.msra.mxu0 %v622
        %632 = vmatprep.subr.mxu0 0.0
        %633 = vmatpush1.msra.mxu0 %v623
        %634 = vmatprep.subr.mxu0 0.0
        %635 = vmatpush1.msra.mxu0 0.0
        %636 = vmatprep.subr.mxu0 0.0
        %637 = vmatpush1.msra.mxu0 0.0
        %638 = vmatprep.subr.mxu0 0.0
        %639 = vmatpush1.msra.mxu0 0.0
        %640 = vmatprep.subr.mxu0 0.0
        %641 = vmatpush1.msra.mxu0 0.0
        %642 = vmatprep.subr.mxu0 0.0
        %643 = vmatpush1.msra.mxu0 0.0
        %644 = vmatprep.subr.mxu0 0.0
        %645 = vmatpush1.msra.mxu0 0.0
        %646 = vmatprep.subr.mxu0 0.0
        %647 = vmatpush1.msra.mxu0 0.0
        %648 = vmatprep.subr.mxu0 0.0
        %649 = vmatpush1.msra.mxu0 0.0
        %650 = vmatprep.subr.mxu0 0.0
        %651 = vmatpush1.msra.mxu0 0.0
        %652 = vmatprep.subr.mxu0 0.0
        %653 = vmatpush1.msra.mxu0 0.0
        %654 = vmatprep.subr.mxu0 0.0
        %655 = vmatpush1.msra.mxu0 0.0
        %656 = vmatprep.subr.mxu0 0.0
        %657 = vmatpush1.msra.mxu0 0.0
        %658 = vmatprep.subr.mxu0 0.0
        %659 = vmatpush1.msra.mxu0 0.0
        %660 = vmatprep.subr.mxu0 0.0
        %661 = vmatpush1.msra.mxu0 0.0
        %662 = vmatprep.subr.mxu0 0.0
        %663 = vmatpush1.msra.mxu0 0.0
        %664 = vmatprep.subr.mxu0 0.0
        %665 = vmatpush1.msra.mxu0 0.0
        %666 = vmatprep.subr.mxu0 0.0
        %667 = vmatpush1.msra.mxu0 0.0
        %668 = vmatprep.subr.mxu0 0.0
        %669 = vmatpush1.msra.mxu0 0.0
        %670 = vmatprep.subr.mxu0 0.0
        %671 = vmatpush1.msra.mxu0 0.0
        %672 = vmatprep.subr.mxu0 0.0
        %673 = vmatpush1.msra.mxu0 0.0
        %674 = vmatprep.subr.mxu0 0.0
        %675 = vmatpush1.msra.mxu0 0.0
        %676 = vmatprep.subr.mxu0 0.0
        %677 = vmatpush1.msra.mxu0 0.0
        %678 = vmatprep.subr.mxu0 0.0
        %679 = vmatpush1.msra.mxu0 0.0
        %680 = vmatprep.subr.mxu0 0.0
        %681 = vmatpush1.msra.mxu0 0.0
        %682 = vmatprep.subr.mxu0 0.0
        %683 = vmatpush1.msra.mxu0 0.0
        %684 = vmatprep.subr.mxu0 0.0
        %685 = vmatpush1.msra.mxu0 0.0
        %686 = vmatprep.subr.mxu0 0.0
        %687 = vmatpush1.msra.mxu0 0.0
        %688 = vmatprep.subr.mxu0 0.0
        %689 = vmatpush1.msra.mxu0 0.0
        %690 = vmatprep.subr.mxu0 0.0
        %691 = vmatpush1.msra.mxu0 0.0
        %692 = vmatprep.subr.mxu0 0.0
        %693 = vmatpush1.msra.mxu0 0.0
        %694 = vmatprep.mubr.f32.mxu0 0.0
        %695 = vmatmul.mubr.f32.gmra.mrb[0].mxu0 %v625
        %v696 = vpop.f32.mrb[0].mxu0
        %v697 = vadd.f32 0.0, %v696
        %v698 = vpop.f32.mrb[0].mxu0
        %699 = vmatprep.mubr.f32.mxu0 0.0
        %700 = vmatmul.mubr.f32.gmra.mrb[0].mxu0 %v628
        %v701 = vpop.f32.mrb[0].mxu0
        %v702 = vadd.f32 0.0, %v701
        %v703 = vpop.f32.mrb[0].mxu0
        %704 = vdwg.mxu0
        %v705 = vadd.f32 %v617, %v697
        %v706 = vadd.f32 %v618, %v702
        %v707 = vld [vmem:[#allocation2 + $0x5] sm:$0xff]
        %v708 = vld [vmem:[#allocation2 + $0xd] sm:$0xff]
        %s709 = scalar_lea.vmem %s2, 80
        %v710 = vld [vmem:[%s709] sm:$0xff]
        %v711 = vld [vmem:[%s709 + $0x8] sm:$0xff]
        %v713 = vsel %vm230, %v707, 0
        %v716 = vsel %vm230, %v708, 0
        %718 = vmatprep.subr.mxu0 0.0
        %719 = vmatpush1.msra.mxu0 %v710
        %720 = vmatprep.subr.mxu0 0.0
        %721 = vmatpush1.msra.mxu0 %v711
        %722 = vmatprep.subr.mxu0 0.0
        %723 = vmatpush1.msra.mxu0 0.0
        %724 = vmatprep.subr.mxu0 0.0
        %725 = vmatpush1.msra.mxu0 0.0
        %726 = vmatprep.subr.mxu0 0.0
        %727 = vmatpush1.msra.mxu0 0.0
        %728 = vmatprep.subr.mxu0 0.0
        %729 = vmatpush1.msra.mxu0 0.0
        %730 = vmatprep.subr.mxu0 0.0
        %731 = vmatpush1.msra.mxu0 0.0
        %732 = vmatprep.subr.mxu0 0.0
        %733 = vmatpush1.msra.mxu0 0.0
        %734 = vmatprep.subr.mxu0 0.0
        %735 = vmatpush1.msra.mxu0 0.0
        %736 = vmatprep.subr.mxu0 0.0
        %737 = vmatpush1.msra.mxu0 0.0
        %738 = vmatprep.subr.mxu0 0.0
        %739 = vmatpush1.msra.mxu0 0.0
        %740 = vmatprep.subr.mxu0 0.0
        %741 = vmatpush1.msra.mxu0 0.0
        %742 = vmatprep.subr.mxu0 0.0
        %743 = vmatpush1.msra.mxu0 0.0
        %744 = vmatprep.subr.mxu0 0.0
        %745 = vmatpush1.msra.mxu0 0.0
        %746 = vmatprep.subr.mxu0 0.0
        %747 = vmatpush1.msra.mxu0 0.0
        %748 = vmatprep.subr.mxu0 0.0
        %749 = vmatpush1.msra.mxu0 0.0
        %750 = vmatprep.subr.mxu0 0.0
        %751 = vmatpush1.msra.mxu0 0.0
        %752 = vmatprep.subr.mxu0 0.0
        %753 = vmatpush1.msra.mxu0 0.0
        %754 = vmatprep.subr.mxu0 0.0
        %755 = vmatpush1.msra.mxu0 0.0
        %756 = vmatprep.subr.mxu0 0.0
        %757 = vmatpush1.msra.mxu0 0.0
        %758 = vmatprep.subr.mxu0 0.0
        %759 = vmatpush1.msra.mxu0 0.0
        %760 = vmatprep.subr.mxu0 0.0
        %761 = vmatpush1.msra.mxu0 0.0
        %762 = vmatprep.subr.mxu0 0.0
        %763 = vmatpush1.msra.mxu0 0.0
        %764 = vmatprep.subr.mxu0 0.0
        %765 = vmatpush1.msra.mxu0 0.0
        %766 = vmatprep.subr.mxu0 0.0
        %767 = vmatpush1.msra.mxu0 0.0
        %768 = vmatprep.subr.mxu0 0.0
        %769 = vmatpush1.msra.mxu0 0.0
        %770 = vmatprep.subr.mxu0 0.0
        %771 = vmatpush1.msra.mxu0 0.0
        %772 = vmatprep.subr.mxu0 0.0
        %773 = vmatpush1.msra.mxu0 0.0
        %774 = vmatprep.subr.mxu0 0.0
        %775 = vmatpush1.msra.mxu0 0.0
        %776 = vmatprep.subr.mxu0 0.0
        %777 = vmatpush1.msra.mxu0 0.0
        %778 = vmatprep.subr.mxu0 0.0
        %779 = vmatpush1.msra.mxu0 0.0
        %780 = vmatprep.subr.mxu0 0.0
        %781 = vmatpush1.msra.mxu0 0.0
        %782 = vmatprep.mubr.f32.mxu0 0.0
        %783 = vmatmul.mubr.f32.gmra.mrb[0].mxu0 %v713
        %v784 = vpop.f32.mrb[0].mxu0
        %v785 = vadd.f32 0.0, %v784
        %v786 = vpop.f32.mrb[0].mxu0
        %787 = vmatprep.mubr.f32.mxu0 0.0
        %788 = vmatmul.mubr.f32.gmra.mrb[0].mxu0 %v716
        %v789 = vpop.f32.mrb[0].mxu0
        %v790 = vadd.f32 0.0, %v789
        %v791 = vpop.f32.mrb[0].mxu0
        %792 = vdwg.mxu0
        %v793 = vadd.f32 %v705, %v785
        %v794 = vadd.f32 %v706, %v790
        %v795 = vld [vmem:[#allocation2 + $0x6] sm:$0xff]
        %v796 = vld [vmem:[#allocation2 + $0xe] sm:$0xff]
        %s797 = scalar_lea.vmem %s2, 96
        %v798 = vld [vmem:[%s797] sm:$0xff]
        %v799 = vld [vmem:[%s797 + $0x8] sm:$0xff]
        %v801 = vsel %vm230, %v795, 0
        %v804 = vsel %vm230, %v796, 0
        %806 = vmatprep.subr.mxu0 0.0
        %807 = vmatpush1.msra.mxu0 %v798
        %808 = vmatprep.subr.mxu0 0.0
        %809 = vmatpush1.msra.mxu0 %v799
        %810 = vmatprep.subr.mxu0 0.0
        %811 = vmatpush1.msra.mxu0 0.0
        %812 = vmatprep.subr.mxu0 0.0
        %813 = vmatpush1.msra.mxu0 0.0
        %814 = vmatprep.subr.mxu0 0.0
        %815 = vmatpush1.msra.mxu0 0.0
        %816 = vmatprep.subr.mxu0 0.0
        %817 = vmatpush1.msra.mxu0 0.0
        %818 = vmatprep.subr.mxu0 0.0
        %819 = vmatpush1.msra.mxu0 0.0
        %820 = vmatprep.subr.mxu0 0.0
        %821 = vmatpush1.msra.mxu0 0.0
        %822 = vmatprep.subr.mxu0 0.0
        %823 = vmatpush1.msra.mxu0 0.0
        %824 = vmatprep.subr.mxu0 0.0
        %825 = vmatpush1.msra.mxu0 0.0
        %826 = vmatprep.subr.mxu0 0.0
        %827 = vmatpush1.msra.mxu0 0.0
        %828 = vmatprep.subr.mxu0 0.0
        %829 = vmatpush1.msra.mxu0 0.0
        %830 = vmatprep.subr.mxu0 0.0
        %831 = vmatpush1.msra.mxu0 0.0
        %832 = vmatprep.subr.mxu0 0.0
        %833 = vmatpush1.msra.mxu0 0.0
        %834 = vmatprep.subr.mxu0 0.0
        %835 = vmatpush1.msra.mxu0 0.0
        %836 = vmatprep.subr.mxu0 0.0
        %837 = vmatpush1.msra.mxu0 0.0
        %838 = vmatprep.subr.mxu0 0.0
        %839 = vmatpush1.msra.mxu0 0.0
        %840 = vmatprep.subr.mxu0 0.0
        %841 = vmatpush1.msra.mxu0 0.0
        %842 = vmatprep.subr.mxu0 0.0
        %843 = vmatpush1.msra.mxu0 0.0
        %844 = vmatprep.subr.mxu0 0.0
        %845 = vmatpush1.msra.mxu0 0.0
        %846 = vmatprep.subr.mxu0 0.0
        %847 = vmatpush1.msra.mxu0 0.0
        %848 = vmatprep.subr.mxu0 0.0
        %849 = vmatpush1.msra.mxu0 0.0
        %850 = vmatprep.subr.mxu0 0.0
        %851 = vmatpush1.msra.mxu0 0.0
        %852 = vmatprep.subr.mxu0 0.0
        %853 = vmatpush1.msra.mxu0 0.0
        %854 = vmatprep.subr.mxu0 0.0
        %855 = vmatpush1.msra.mxu0 0.0
        %856 = vmatprep.subr.mxu0 0.0
        %857 = vmatpush1.msra.mxu0 0.0
        %858 = vmatprep.subr.mxu0 0.0
        %859 = vmatpush1.msra.mxu0 0.0
        %860 = vmatprep.subr.mxu0 0.0
        %861 = vmatpush1.msra.mxu0 0.0
        %862 = vmatprep.subr.mxu0 0.0
        %863 = vmatpush1.msra.mxu0 0.0
        %864 = vmatprep.subr.mxu0 0.0
        %865 = vmatpush1.msra.mxu0 0.0
        %866 = vmatprep.subr.mxu0 0.0
        %867 = vmatpush1.msra.mxu0 0.0
        %868 = vmatprep.subr.mxu0 0.0
        %869 = vmatpush1.msra.mxu0 0.0
        %870 = vmatprep.mubr.f32.mxu0 0.0
        %871 = vmatmul.mubr.f32.gmra.mrb[0].mxu0 %v801
        %v872 = vpop.f32.mrb[0].mxu0
        %v873 = vadd.f32 0.0, %v872
        %v874 = vpop.f32.mrb[0].mxu0
        %875 = vmatprep.mubr.f32.mxu0 0.0
        %876 = vmatmul.mubr.f32.gmra.mrb[0].mxu0 %v804
        %v877 = vpop.f32.mrb[0].mxu0
        %v878 = vadd.f32 0.0, %v877
        %v879 = vpop.f32.mrb[0].mxu0
        %880 = vdwg.mxu0
        %v881 = vadd.f32 %v793, %v873
        %v882 = vadd.f32 %v794, %v878
        %v883 = vld [vmem:[%s265] sm:$0xff]
        %v884 = vld [vmem:[%s265 + $0x8] sm:$0xff]
        %s885 = scalar_lea.vmem %s2, 112
        %v886 = vld [vmem:[%s885] sm:$0xff]
        %v887 = vld [vmem:[%s885 + $0x8] sm:$0xff]
        %v889 = vsel %vm230, %v883, 0
        %v892 = vsel %vm230, %v884, 0
        %894 = vmatprep.subr.mxu0 0.0
        %895 = vmatpush1.msra.mxu0 %v886
        %896 = vmatprep.subr.mxu0 0.0
        %897 = vmatpush1.msra.mxu0 %v887
        %898 = vmatprep.subr.mxu0 0.0
        %899 = vmatpush1.msra.mxu0 0.0
        %900 = vmatprep.subr.mxu0 0.0
        %901 = vmatpush1.msra.mxu0 0.0
        %902 = vmatprep.subr.mxu0 0.0
        %903 = vmatpush1.msra.mxu0 0.0
        %904 = vmatprep.subr.mxu0 0.0
        %905 = vmatpush1.msra.mxu0 0.0
        %906 = vmatprep.subr.mxu0 0.0
        %907 = vmatpush1.msra.mxu0 0.0
        %908 = vmatprep.subr.mxu0 0.0
        %909 = vmatpush1.msra.mxu0 0.0
        %910 = vmatprep.subr.mxu0 0.0
        %911 = vmatpush1.msra.mxu0 0.0
        %912 = vmatprep.subr.mxu0 0.0
        %913 = vmatpush1.msra.mxu0 0.0
        %914 = vmatprep.subr.mxu0 0.0
        %915 = vmatpush1.msra.mxu0 0.0
        %916 = vmatprep.subr.mxu0 0.0
        %917 = vmatpush1.msra.mxu0 0.0
        %918 = vmatprep.subr.mxu0 0.0
        %919 = vmatpush1.msra.mxu0 0.0
        %920 = vmatprep.subr.mxu0 0.0
        %921 = vmatpush1.msra.mxu0 0.0
        %922 = vmatprep.subr.mxu0 0.0
        %923 = vmatpush1.msra.mxu0 0.0
        %924 = vmatprep.subr.mxu0 0.0
        %925 = vmatpush1.msra.mxu0 0.0
        %926 = vmatprep.subr.mxu0 0.0
        %927 = vmatpush1.msra.mxu0 0.0
        %928 = vmatprep.subr.mxu0 0.0
        %929 = vmatpush1.msra.mxu0 0.0
        %930 = vmatprep.subr.mxu0 0.0
        %931 = vmatpush1.msra.mxu0 0.0
        %932 = vmatprep.subr.mxu0 0.0
        %933 = vmatpush1.msra.mxu0 0.0
        %934 = vmatprep.subr.mxu0 0.0
        %935 = vmatpush1.msra.mxu0 0.0
        %936 = vmatprep.subr.mxu0 0.0
        %937 = vmatpush1.msra.mxu0 0.0
        %938 = vmatprep.subr.mxu0 0.0
        %939 = vmatpush1.msra.mxu0 0.0
        %940 = vmatprep.subr.mxu0 0.0
        %941 = vmatpush1.msra.mxu0 0.0
        %942 = vmatprep.subr.mxu0 0.0
        %943 = vmatpush1.msra.mxu0 0.0
        %944 = vmatprep.subr.mxu0 0.0
        %945 = vmatpush1.msra.mxu0 0.0
        %946 = vmatprep.subr.mxu0 0.0
        %947 = vmatpush1.msra.mxu0 0.0
        %948 = vmatprep.subr.mxu0 0.0
        %949 = vmatpush1.msra.mxu0 0.0
        %950 = vmatprep.subr.mxu0 0.0
        %951 = vmatpush1.msra.mxu0 0.0
        %952 = vmatprep.subr.mxu0 0.0
        %953 = vmatpush1.msra.mxu0 0.0
        %954 = vmatprep.subr.mxu0 0.0
        %955 = vmatpush1.msra.mxu0 0.0
        %956 = vmatprep.subr.mxu0 0.0
        %957 = vmatpush1.msra.mxu0 0.0
        %958 = vmatprep.mubr.f32.mxu0 0.0
        %959 = vmatmul.mubr.f32.gmra.mrb[0].mxu0 %v889
        %v960 = vpop.f32.mrb[0].mxu0
        %v961 = vadd.f32 0.0, %v960
        %v962 = vpop.f32.mrb[0].mxu0
        %963 = vmatprep.mubr.f32.mxu0 0.0
        %964 = vmatmul.mubr.f32.gmra.mrb[0].mxu0 %v892
        %v965 = vpop.f32.mrb[0].mxu0
        %v966 = vadd.f32 0.0, %v965
        %v967 = vpop.f32.mrb[0].mxu0
        %968 = vdwg.mxu0
        %v969 = vadd.f32 %v881, %v961
        %v970 = vadd.f32 %v882, %v966
        %v971 = vld [vmem:[%s265 + $0x1] sm:$0xff]
        %v972 = vld [vmem:[%s265 + $0x9] sm:$0xff]
        %s973 = scalar_lea.vmem %s2, 128
        %v974 = vld [vmem:[%s973] sm:$0xff]
        %v975 = vld [vmem:[%s973 + $0x8] sm:$0xff]
        %v977 = vsel %vm230, %v971, 0
        %v980 = vsel %vm230, %v972, 0
        %982 = vmatprep.subr.mxu0 0.0
        %983 = vmatpush1.msra.mxu0 %v974
        %984 = vmatprep.subr.mxu0 0.0
        %985 = vmatpush1.msra.mxu0 %v975
        %986 = vmatprep.subr.mxu0 0.0
        %987 = vmatpush1.msra.mxu0 0.0
        %988 = vmatprep.subr.mxu0 0.0
        %989 = vmatpush1.msra.mxu0 0.0
        %990 = vmatprep.subr.mxu0 0.0
        %991 = vmatpush1.msra.mxu0 0.0
        %992 = vmatprep.subr.mxu0 0.0
        %993 = vmatpush1.msra.mxu0 0.0
        %994 = vmatprep.subr.mxu0 0.0
        %995 = vmatpush1.msra.mxu0 0.0
        %996 = vmatprep.subr.mxu0 0.0
        %997 = vmatpush1.msra.mxu0 0.0
        %998 = vmatprep.subr.mxu0 0.0
        %999 = vmatpush1.msra.mxu0 0.0
        %1000 = vmatprep.subr.mxu0 0.0
        %1001 = vmatpush1.msra.mxu0 0.0
        %1002 = vmatprep.subr.mxu0 0.0
        %1003 = vmatpush1.msra.mxu0 0.0
        %1004 = vmatprep.subr.mxu0 0.0
        %1005 = vmatpush1.msra.mxu0 0.0
        %1006 = vmatprep.subr.mxu0 0.0
        %1007 = vmatpush1.msra.mxu0 0.0
        %1008 = vmatprep.subr.mxu0 0.0
        %1009 = vmatpush1.msra.mxu0 0.0
        %1010 = vmatprep.subr.mxu0 0.0
        %1011 = vmatpush1.msra.mxu0 0.0
        %1012 = vmatprep.subr.mxu0 0.0
        %1013 = vmatpush1.msra.mxu0 0.0
        %1014 = vmatprep.subr.mxu0 0.0
        %1015 = vmatpush1.msra.mxu0 0.0
        %1016 = vmatprep.subr.mxu0 0.0
        %1017 = vmatpush1.msra.mxu0 0.0
        %1018 = vmatprep.subr.mxu0 0.0
        %1019 = vmatpush1.msra.mxu0 0.0
        %1020 = vmatprep.subr.mxu0 0.0
        %1021 = vmatpush1.msra.mxu0 0.0
        %1022 = vmatprep.subr.mxu0 0.0
        %1023 = vmatpush1.msra.mxu0 0.0
        %1024 = vmatprep.subr.mxu0 0.0
        %1025 = vmatpush1.msra.mxu0 0.0
        %1026 = vmatprep.subr.mxu0 0.0
        %1027 = vmatpush1.msra.mxu0 0.0
        %1028 = vmatprep.subr.mxu0 0.0
        %1029 = vmatpush1.msra.mxu0 0.0
        %1030 = vmatprep.subr.mxu0 0.0
        %1031 = vmatpush1.msra.mxu0 0.0
        %1032 = vmatprep.subr.mxu0 0.0
        %1033 = vmatpush1.msra.mxu0 0.0
        %1034 = vmatprep.subr.mxu0 0.0
        %1035 = vmatpush1.msra.mxu0 0.0
        %1036 = vmatprep.subr.mxu0 0.0
        %1037 = vmatpush1.msra.mxu0 0.0
        %1038 = vmatprep.subr.mxu0 0.0
        %1039 = vmatpush1.msra.mxu0 0.0
        %1040 = vmatprep.subr.mxu0 0.0
        %1041 = vmatpush1.msra.mxu0 0.0
        %1042 = vmatprep.subr.mxu0 0.0
        %1043 = vmatpush1.msra.mxu0 0.0
        %1044 = vmatprep.subr.mxu0 0.0
        %1045 = vmatpush1.msra.mxu0 0.0
        %1046 = vmatprep.mubr.f32.mxu0 0.0
        %1047 = vmatmul.mubr.f32.gmra.mrb[0].mxu0 %v977
        %v1048 = vpop.f32.mrb[0].mxu0
        %v1049 = vadd.f32 0.0, %v1048
        %v1050 = vpop.f32.mrb[0].mxu0
        %1051 = vmatprep.mubr.f32.mxu0 0.0
        %1052 = vmatmul.mubr.f32.gmra.mrb[0].mxu0 %v980
        %v1053 = vpop.f32.mrb[0].mxu0
        %v1054 = vadd.f32 0.0, %v1053
        %v1055 = vpop.f32.mrb[0].mxu0
        %1056 = vdwg.mxu0
        %v1057 = vadd.f32 %v969, %v1049
        %v1058 = vadd.f32 %v970, %v1054
        %v1059 = vld [vmem:[%s265 + $0x2] sm:$0xff]
        %v1060 = vld [vmem:[%s265 + $0xa] sm:$0xff]
        %s1061 = scalar_lea.vmem %s2, 144
        %v1062 = vld [vmem:[%s1061] sm:$0xff]
        %v1063 = vld [vmem:[%s1061 + $0x8] sm:$0xff]
        %v1065 = vsel %vm230, %v1059, 0
        %v1068 = vsel %vm230, %v1060, 0
        %1070 = vmatprep.subr.mxu0 0.0
        %1071 = vmatpush1.msra.mxu0 %v1062
        %1072 = vmatprep.subr.mxu0 0.0
        %1073 = vmatpush1.msra.mxu0 %v1063
        %1074 = vmatprep.subr.mxu0 0.0
        %1075 = vmatpush1.msra.mxu0 0.0
        %1076 = vmatprep.subr.mxu0 0.0
        %1077 = vmatpush1.msra.mxu0 0.0
        %1078 = vmatprep.subr.mxu0 0.0
        %1079 = vmatpush1.msra.mxu0 0.0
        %1080 = vmatprep.subr.mxu0 0.0
        %1081 = vmatpush1.msra.mxu0 0.0
        %1082 = vmatprep.subr.mxu0 0.0
        %1083 = vmatpush1.msra.mxu0 0.0
        %1084 = vmatprep.subr.mxu0 0.0
        %1085 = vmatpush1.msra.mxu0 0.0
        %1086 = vmatprep.subr.mxu0 0.0
        %1087 = vmatpush1.msra.mxu0 0.0
        %1088 = vmatprep.subr.mxu0 0.0
        %1089 = vmatpush1.msra.mxu0 0.0
        %1090 = vmatprep.subr.mxu0 0.0
        %1091 = vmatpush1.msra.mxu0 0.0
        %1092 = vmatprep.subr.mxu0 0.0
        %1093 = vmatpush1.msra.mxu0 0.0
        %1094 = vmatprep.subr.mxu0 0.0
        %1095 = vmatpush1.msra.mxu0 0.0
        %1096 = vmatprep.subr.mxu0 0.0
        %1097 = vmatpush1.msra.mxu0 0.0
        %1098 = vmatprep.subr.mxu0 0.0
        %1099 = vmatpush1.msra.mxu0 0.0
        %1100 = vmatprep.subr.mxu0 0.0
        %1101 = vmatpush1.msra.mxu0 0.0
        %1102 = vmatprep.subr.mxu0 0.0
        %1103 = vmatpush1.msra.mxu0 0.0
        %1104 = vmatprep.subr.mxu0 0.0
        %1105 = vmatpush1.msra.mxu0 0.0
        %1106 = vmatprep.subr.mxu0 0.0
        %1107 = vmatpush1.msra.mxu0 0.0
        %1108 = vmatprep.subr.mxu0 0.0
        %1109 = vmatpush1.msra.mxu0 0.0
        %1110 = vmatprep.subr.mxu0 0.0
        %1111 = vmatpush1.msra.mxu0 0.0
        %1112 = vmatprep.subr.mxu0 0.0
        %1113 = vmatpush1.msra.mxu0 0.0
        %1114 = vmatprep.subr.mxu0 0.0
        %1115 = vmatpush1.msra.mxu0 0.0
        %1116 = vmatprep.subr.mxu0 0.0
        %1117 = vmatpush1.msra.mxu0 0.0
        %1118 = vmatprep.subr.mxu0 0.0
        %1119 = vmatpush1.msra.mxu0 0.0
        %1120 = vmatprep.subr.mxu0 0.0
        %1121 = vmatpush1.msra.mxu0 0.0
        %1122 = vmatprep.subr.mxu0 0.0
        %1123 = vmatpush1.msra.mxu0 0.0
        %1124 = vmatprep.subr.mxu0 0.0
        %1125 = vmatpush1.msra.mxu0 0.0
        %1126 = vmatprep.subr.mxu0 0.0
        %1127 = vmatpush1.msra.mxu0 0.0
        %1128 = vmatprep.subr.mxu0 0.0
        %1129 = vmatpush1.msra.mxu0 0.0
        %1130 = vmatprep.subr.mxu0 0.0
        %1131 = vmatpush1.msra.mxu0 0.0
        %1132 = vmatprep.subr.mxu0 0.0
        %1133 = vmatpush1.msra.mxu0 0.0
        %1134 = vmatprep.mubr.f32.mxu0 0.0
        %1135 = vmatmul.mubr.f32.gmra.mrb[0].mxu0 %v1065
        %v1136 = vpop.f32.mrb[0].mxu0
        %v1137 = vadd.f32 0.0, %v1136
        %v1138 = vpop.f32.mrb[0].mxu0
        %1139 = vmatprep.mubr.f32.mxu0 0.0
        %1140 = vmatmul.mubr.f32.gmra.mrb[0].mxu0 %v1068
        %v1141 = vpop.f32.mrb[0].mxu0
        %v1142 = vadd.f32 0.0, %v1141
        %v1143 = vpop.f32.mrb[0].mxu0
        %1144 = vdwg.mxu0
        %v1145 = vadd.f32 %v1057, %v1137
        %v1146 = vadd.f32 %v1058, %v1142
        %v1147 = vld [vmem:[%s265 + $0x3] sm:$0xff]
        %v1148 = vld [vmem:[%s265 + $0xb] sm:$0xff]
        %s1149 = scalar_lea.vmem %s2, 160
        %v1150 = vld [vmem:[%s1149] sm:$0xff]
        %v1151 = vld [vmem:[%s1149 + $0x8] sm:$0xff]
        %v1153 = vsel %vm230, %v1147, 0
        %v1156 = vsel %vm230, %v1148, 0
        %1158 = vmatprep.subr.mxu0 0.0
        %1159 = vmatpush1.msra.mxu0 %v1150
        %1160 = vmatprep.subr.mxu0 0.0
        %1161 = vmatpush1.msra.mxu0 %v1151
        %1162 = vmatprep.subr.mxu0 0.0
        %1163 = vmatpush1.msra.mxu0 0.0
        %1164 = vmatprep.subr.mxu0 0.0
        %1165 = vmatpush1.msra.mxu0 0.0
        %1166 = vmatprep.subr.mxu0 0.0
        %1167 = vmatpush1.msra.mxu0 0.0
        %1168 = vmatprep.subr.mxu0 0.0
        %1169 = vmatpush1.msra.mxu0 0.0
        %1170 = vmatprep.subr.mxu0 0.0
        %1171 = vmatpush1.msra.mxu0 0.0
        %1172 = vmatprep.subr.mxu0 0.0
        %1173 = vmatpush1.msra.mxu0 0.0
        %1174 = vmatprep.subr.mxu0 0.0
        %1175 = vmatpush1.msra.mxu0 0.0
        %1176 = vmatprep.subr.mxu0 0.0
        %1177 = vmatpush1.msra.mxu0 0.0
        %1178 = vmatprep.subr.mxu0 0.0
        %1179 = vmatpush1.msra.mxu0 0.0
        %1180 = vmatprep.subr.mxu0 0.0
        %1181 = vmatpush1.msra.mxu0 0.0
        %1182 = vmatprep.subr.mxu0 0.0
        %1183 = vmatpush1.msra.mxu0 0.0
        %1184 = vmatprep.subr.mxu0 0.0
        %1185 = vmatpush1.msra.mxu0 0.0
        %1186 = vmatprep.subr.mxu0 0.0
        %1187 = vmatpush1.msra.mxu0 0.0
        %1188 = vmatprep.subr.mxu0 0.0
        %1189 = vmatpush1.msra.mxu0 0.0
        %1190 = vmatprep.subr.mxu0 0.0
        %1191 = vmatpush1.msra.mxu0 0.0
        %1192 = vmatprep.subr.mxu0 0.0
        %1193 = vmatpush1.msra.mxu0 0.0
        %1194 = vmatprep.subr.mxu0 0.0
        %1195 = vmatpush1.msra.mxu0 0.0
        %1196 = vmatprep.subr.mxu0 0.0
        %1197 = vmatpush1.msra.mxu0 0.0
        %1198 = vmatprep.subr.mxu0 0.0
        %1199 = vmatpush1.msra.mxu0 0.0
        %1200 = vmatprep.subr.mxu0 0.0
        %1201 = vmatpush1.msra.mxu0 0.0
        %1202 = vmatprep.subr.mxu0 0.0
        %1203 = vmatpush1.msra.mxu0 0.0
        %1204 = vmatprep.subr.mxu0 0.0
        %1205 = vmatpush1.msra.mxu0 0.0
        %1206 = vmatprep.subr.mxu0 0.0
        %1207 = vmatpush1.msra.mxu0 0.0
        %1208 = vmatprep.subr.mxu0 0.0
        %1209 = vmatpush1.msra.mxu0 0.0
        %1210 = vmatprep.subr.mxu0 0.0
        %1211 = vmatpush1.msra.mxu0 0.0
        %1212 = vmatprep.subr.mxu0 0.0
        %1213 = vmatpush1.msra.mxu0 0.0
        %1214 = vmatprep.subr.mxu0 0.0
        %1215 = vmatpush1.msra.mxu0 0.0
        %1216 = vmatprep.subr.mxu0 0.0
        %1217 = vmatpush1.msra.mxu0 0.0
        %1218 = vmatprep.subr.mxu0 0.0
        %1219 = vmatpush1.msra.mxu0 0.0
        %1220 = vmatprep.subr.mxu0 0.0
        %1221 = vmatpush1.msra.mxu0 0.0
        %1222 = vmatprep.mubr.f32.mxu0 0.0
        %1223 = vmatmul.mubr.f32.gmra.mrb[0].mxu0 %v1153
        %v1224 = vpop.f32.mrb[0].mxu0
        %v1225 = vadd.f32 0.0, %v1224
        %v1226 = vpop.f32.mrb[0].mxu0
        %1227 = vmatprep.mubr.f32.mxu0 0.0
        %1228 = vmatmul.mubr.f32.gmra.mrb[0].mxu0 %v1156
        %v1229 = vpop.f32.mrb[0].mxu0
        %v1230 = vadd.f32 0.0, %v1229
        %v1231 = vpop.f32.mrb[0].mxu0
        %1232 = vdwg.mxu0
        %v1233 = vadd.f32 %v1145, %v1225
        %v1234 = vadd.f32 %v1146, %v1230
        %v1235 = vld [vmem:[%s265 + $0x4] sm:$0xff]
        %v1236 = vld [vmem:[%s265 + $0xc] sm:$0xff]
        %s1237 = scalar_lea.vmem %s2, 176
        %v1238 = vld [vmem:[%s1237] sm:$0xff]
        %v1239 = vld [vmem:[%s1237 + $0x8] sm:$0xff]
        %v1241 = vsel %vm230, %v1235, 0
        %v1244 = vsel %vm230, %v1236, 0
        %1246 = vmatprep.subr.mxu0 0.0
        %1247 = vmatpush1.msra.mxu0 %v1238
        %1248 = vmatprep.subr.mxu0 0.0
        %1249 = vmatpush1.msra.mxu0 %v1239
        %1250 = vmatprep.subr.mxu0 0.0
        %1251 = vmatpush1.msra.mxu0 0.0
        %1252 = vmatprep.subr.mxu0 0.0
        %1253 = vmatpush1.msra.mxu0 0.0
        %1254 = vmatprep.subr.mxu0 0.0
        %1255 = vmatpush1.msra.mxu0 0.0
        %1256 = vmatprep.subr.mxu0 0.0
        %1257 = vmatpush1.msra.mxu0 0.0
        %1258 = vmatprep.subr.mxu0 0.0
        %1259 = vmatpush1.msra.mxu0 0.0
        %1260 = vmatprep.subr.mxu0 0.0
        %1261 = vmatpush1.msra.mxu0 0.0
        %1262 = vmatprep.subr.mxu0 0.0
        %1263 = vmatpush1.msra.mxu0 0.0
        %1264 = vmatprep.subr.mxu0 0.0
        %1265 = vmatpush1.msra.mxu0 0.0
        %1266 = vmatprep.subr.mxu0 0.0
        %1267 = vmatpush1.msra.mxu0 0.0
        %1268 = vmatprep.subr.mxu0 0.0
        %1269 = vmatpush1.msra.mxu0 0.0
        %1270 = vmatprep.subr.mxu0 0.0
        %1271 = vmatpush1.msra.mxu0 0.0
        %1272 = vmatprep.subr.mxu0 0.0
        %1273 = vmatpush1.msra.mxu0 0.0
        %1274 = vmatprep.subr.mxu0 0.0
        %1275 = vmatpush1.msra.mxu0 0.0
        %1276 = vmatprep.subr.mxu0 0.0
        %1277 = vmatpush1.msra.mxu0 0.0
        %1278 = vmatprep.subr.mxu0 0.0
        %1279 = vmatpush1.msra.mxu0 0.0
        %1280 = vmatprep.subr.mxu0 0.0
        %1281 = vmatpush1.msra.mxu0 0.0
        %1282 = vmatprep.subr.mxu0 0.0
        %1283 = vmatpush1.msra.mxu0 0.0
        %1284 = vmatprep.subr.mxu0 0.0
        %1285 = vmatpush1.msra.mxu0 0.0
        %1286 = vmatprep.subr.mxu0 0.0
        %1287 = vmatpush1.msra.mxu0 0.0
        %1288 = vmatprep.subr.mxu0 0.0
        %1289 = vmatpush1.msra.mxu0 0.0
        %1290 = vmatprep.subr.mxu0 0.0
        %1291 = vmatpush1.msra.mxu0 0.0
        %1292 = vmatprep.subr.mxu0 0.0
        %1293 = vmatpush1.msra.mxu0 0.0
        %1294 = vmatprep.subr.mxu0 0.0
        %1295 = vmatpush1.msra.mxu0 0.0
        %1296 = vmatprep.subr.mxu0 0.0
        %1297 = vmatpush1.msra.mxu0 0.0
        %1298 = vmatprep.subr.mxu0 0.0
        %1299 = vmatpush1.msra.mxu0 0.0
        %1300 = vmatprep.subr.mxu0 0.0
        %1301 = vmatpush1.msra.mxu0 0.0
        %1302 = vmatprep.subr.mxu0 0.0
        %1303 = vmatpush1.msra.mxu0 0.0
        %1304 = vmatprep.subr.mxu0 0.0
        %1305 = vmatpush1.msra.mxu0 0.0
        %1306 = vmatprep.subr.mxu0 0.0
        %1307 = vmatpush1.msra.mxu0 0.0
        %1308 = vmatprep.subr.mxu0 0.0
        %1309 = vmatpush1.msra.mxu0 0.0
        %1310 = vmatprep.mubr.f32.mxu0 0.0
        %1311 = vmatmul.mubr.f32.gmra.mrb[0].mxu0 %v1241
        %v1312 = vpop.f32.mrb[0].mxu0
        %v1313 = vadd.f32 0.0, %v1312
        %v1314 = vpop.f32.mrb[0].mxu0
        %1315 = vmatprep.mubr.f32.mxu0 0.0
        %1316 = vmatmul.mubr.f32.gmra.mrb[0].mxu0 %v1244
        %v1317 = vpop.f32.mrb[0].mxu0
        %v1318 = vadd.f32 0.0, %v1317
        %v1319 = vpop.f32.mrb[0].mxu0
        %1320 = vdwg.mxu0
        %v1321 = vadd.f32 %v1233, %v1313
        %v1322 = vadd.f32 %v1234, %v1318
        %v1323 = vld [vmem:[%s265 + $0x5] sm:$0xff]
        %v1324 = vld [vmem:[%s265 + $0xd] sm:$0xff]
        %s1325 = scalar_lea.vmem %s2, 192
        %v1326 = vld [vmem:[%s1325] sm:$0xff]
        %v1327 = vld [vmem:[%s1325 + $0x8] sm:$0xff]
        %v1329 = vsel %vm230, %v1323, 0
        %v1332 = vsel %vm230, %v1324, 0
        %1334 = vmatprep.subr.mxu0 0.0
        %1335 = vmatpush1.msra.mxu0 %v1326
        %1336 = vmatprep.subr.mxu0 0.0
        %1337 = vmatpush1.msra.mxu0 %v1327
        %1338 = vmatprep.subr.mxu0 0.0
        %1339 = vmatpush1.msra.mxu0 0.0
        %1340 = vmatprep.subr.mxu0 0.0
        %1341 = vmatpush1.msra.mxu0 0.0
        %1342 = vmatprep.subr.mxu0 0.0
        %1343 = vmatpush1.msra.mxu0 0.0
        %1344 = vmatprep.subr.mxu0 0.0
        %1345 = vmatpush1.msra.mxu0 0.0
        %1346 = vmatprep.subr.mxu0 0.0
        %1347 = vmatpush1.msra.mxu0 0.0
        %1348 = vmatprep.subr.mxu0 0.0
        %1349 = vmatpush1.msra.mxu0 0.0
        %1350 = vmatprep.subr.mxu0 0.0
        %1351 = vmatpush1.msra.mxu0 0.0
        %1352 = vmatprep.subr.mxu0 0.0
        %1353 = vmatpush1.msra.mxu0 0.0
        %1354 = vmatprep.subr.mxu0 0.0
        %1355 = vmatpush1.msra.mxu0 0.0
        %1356 = vmatprep.subr.mxu0 0.0
        %1357 = vmatpush1.msra.mxu0 0.0
        %1358 = vmatprep.subr.mxu0 0.0
        %1359 = vmatpush1.msra.mxu0 0.0
        %1360 = vmatprep.subr.mxu0 0.0
        %1361 = vmatpush1.msra.mxu0 0.0
        %1362 = vmatprep.subr.mxu0 0.0
        %1363 = vmatpush1.msra.mxu0 0.0
        %1364 = vmatprep.subr.mxu0 0.0
        %1365 = vmatpush1.msra.mxu0 0.0
        %1366 = vmatprep.subr.mxu0 0.0
        %1367 = vmatpush1.msra.mxu0 0.0
        %1368 = vmatprep.subr.mxu0 0.0
        %1369 = vmatpush1.msra.mxu0 0.0
        %1370 = vmatprep.subr.mxu0 0.0
        %1371 = vmatpush1.msra.mxu0 0.0
        %1372 = vmatprep.subr.mxu0 0.0
        %1373 = vmatpush1.msra.mxu0 0.0
        %1374 = vmatprep.subr.mxu0 0.0
        %1375 = vmatpush1.msra.mxu0 0.0
        %1376 = vmatprep.subr.mxu0 0.0
        %1377 = vmatpush1.msra.mxu0 0.0
        %1378 = vmatprep.subr.mxu0 0.0
        %1379 = vmatpush1.msra.mxu0 0.0
        %1380 = vmatprep.subr.mxu0 0.0
        %1381 = vmatpush1.msra.mxu0 0.0
        %1382 = vmatprep.subr.mxu0 0.0
        %1383 = vmatpush1.msra.mxu0 0.0
        %1384 = vmatprep.subr.mxu0 0.0
        %1385 = vmatpush1.msra.mxu0 0.0
        %1386 = vmatprep.subr.mxu0 0.0
        %1387 = vmatpush1.msra.mxu0 0.0
        %1388 = vmatprep.subr.mxu0 0.0
        %1389 = vmatpush1.msra.mxu0 0.0
        %1390 = vmatprep.subr.mxu0 0.0
        %1391 = vmatpush1.msra.mxu0 0.0
        %1392 = vmatprep.subr.mxu0 0.0
        %1393 = vmatpush1.msra.mxu0 0.0
        %1394 = vmatprep.subr.mxu0 0.0
        %1395 = vmatpush1.msra.mxu0 0.0
        %1396 = vmatprep.subr.mxu0 0.0
        %1397 = vmatpush1.msra.mxu0 0.0
        %1398 = vmatprep.mubr.f32.mxu0 0.0
        %1399 = vmatmul.mubr.f32.gmra.mrb[0].mxu0 %v1329
        %v1400 = vpop.f32.mrb[0].mxu0
        %v1401 = vadd.f32 0.0, %v1400
        %v1402 = vpop.f32.mrb[0].mxu0
        %1403 = vmatprep.mubr.f32.mxu0 0.0
        %1404 = vmatmul.mubr.f32.gmra.mrb[0].mxu0 %v1332
        %v1405 = vpop.f32.mrb[0].mxu0
        %v1406 = vadd.f32 0.0, %v1405
        %v1407 = vpop.f32.mrb[0].mxu0
        %1408 = vdwg.mxu0
        %v1409 = vadd.f32 %v1321, %v1401
        %v1410 = vadd.f32 %v1322, %v1406
        %v1411 = vld [vmem:[%s265 + $0x6] sm:$0xff]
        %v1412 = vld [vmem:[%s265 + $0xe] sm:$0xff]
        %s1413 = scalar_lea.vmem %s2, 208
        %v1414 = vld [vmem:[%s1413] sm:$0xff]
        %v1415 = vld [vmem:[%s1413 + $0x8] sm:$0xff]
        %v1417 = vsel %vm230, %v1411, 0
        %v1420 = vsel %vm230, %v1412, 0
        %1422 = vmatprep.subr.mxu0 0.0
        %1423 = vmatpush1.msra.mxu0 %v1414
        %1424 = vmatprep.subr.mxu0 0.0
        %1425 = vmatpush1.msra.mxu0 %v1415
        %1426 = vmatprep.subr.mxu0 0.0
        %1427 = vmatpush1.msra.mxu0 0.0
        %1428 = vmatprep.subr.mxu0 0.0
        %1429 = vmatpush1.msra.mxu0 0.0
        %1430 = vmatprep.subr.mxu0 0.0
        %1431 = vmatpush1.msra.mxu0 0.0
        %1432 = vmatprep.subr.mxu0 0.0
        %1433 = vmatpush1.msra.mxu0 0.0
        %1434 = vmatprep.subr.mxu0 0.0
        %1435 = vmatpush1.msra.mxu0 0.0
        %1436 = vmatprep.subr.mxu0 0.0
        %1437 = vmatpush1.msra.mxu0 0.0
        %1438 = vmatprep.subr.mxu0 0.0
        %1439 = vmatpush1.msra.mxu0 0.0
        %1440 = vmatprep.subr.mxu0 0.0
        %1441 = vmatpush1.msra.mxu0 0.0
        %1442 = vmatprep.subr.mxu0 0.0
        %1443 = vmatpush1.msra.mxu0 0.0
        %1444 = vmatprep.subr.mxu0 0.0
        %1445 = vmatpush1.msra.mxu0 0.0
        %1446 = vmatprep.subr.mxu0 0.0
        %1447 = vmatpush1.msra.mxu0 0.0
        %1448 = vmatprep.subr.mxu0 0.0
        %1449 = vmatpush1.msra.mxu0 0.0
        %1450 = vmatprep.subr.mxu0 0.0
        %1451 = vmatpush1.msra.mxu0 0.0
        %1452 = vmatprep.subr.mxu0 0.0
        %1453 = vmatpush1.msra.mxu0 0.0
        %1454 = vmatprep.subr.mxu0 0.0
        %1455 = vmatpush1.msra.mxu0 0.0
        %1456 = vmatprep.subr.mxu0 0.0
        %1457 = vmatpush1.msra.mxu0 0.0
        %1458 = vmatprep.subr.mxu0 0.0
        %1459 = vmatpush1.msra.mxu0 0.0
        %1460 = vmatprep.subr.mxu0 0.0
        %1461 = vmatpush1.msra.mxu0 0.0
        %1462 = vmatprep.subr.mxu0 0.0
        %1463 = vmatpush1.msra.mxu0 0.0
        %1464 = vmatprep.subr.mxu0 0.0
        %1465 = vmatpush1.msra.mxu0 0.0
        %1466 = vmatprep.subr.mxu0 0.0
        %1467 = vmatpush1.msra.mxu0 0.0
        %1468 = vmatprep.subr.mxu0 0.0
        %1469 = vmatpush1.msra.mxu0 0.0
        %1470 = vmatprep.subr.mxu0 0.0
        %1471 = vmatpush1.msra.mxu0 0.0
        %1472 = vmatprep.subr.mxu0 0.0
        %1473 = vmatpush1.msra.mxu0 0.0
        %1474 = vmatprep.subr.mxu0 0.0
        %1475 = vmatpush1.msra.mxu0 0.0
        %1476 = vmatprep.subr.mxu0 0.0
        %1477 = vmatpush1.msra.mxu0 0.0
        %1478 = vmatprep.subr.mxu0 0.0
        %1479 = vmatpush1.msra.mxu0 0.0
        %1480 = vmatprep.subr.mxu0 0.0
        %1481 = vmatpush1.msra.mxu0 0.0
        %1482 = vmatprep.subr.mxu0 0.0
        %1483 = vmatpush1.msra.mxu0 0.0
        %1484 = vmatprep.subr.mxu0 0.0
        %1485 = vmatpush1.msra.mxu0 0.0
        %1486 = vmatprep.mubr.f32.mxu0 0.0
        %1487 = vmatmul.mubr.f32.gmra.mrb[0].mxu0 %v1417
        %v1488 = vpop.f32.mrb[0].mxu0
        %v1489 = vadd.f32 0.0, %v1488
        %v1490 = vpop.f32.mrb[0].mxu0
        %1491 = vmatprep.mubr.f32.mxu0 0.0
        %1492 = vmatmul.mubr.f32.gmra.mrb[0].mxu0 %v1420
        %v1493 = vpop.f32.mrb[0].mxu0
        %v1494 = vadd.f32 0.0, %v1493
        %v1495 = vpop.f32.mrb[0].mxu0
        %1496 = vdwg.mxu0
        %v1497 = vadd.f32 %v1409, %v1489
        %v1498 = vadd.f32 %v1410, %v1494
        %v1499 = vsub.f32 0.0, %v1497
        %v1500 = vsub.f32 0.0, %v1498
        %v1501 = vmul.f32 %v1499, 1.442695
        %v1502 = vpow.pop %v1501
        %v1503 = vmul.f32 %v1500, 1.442695
        %v1504 = vpow.pop %v1503
        %v1505 = vadd.f32 %v1502, 1.0
        %v1506 = vadd.f32 %v1504, 1.0
        %v1507 = vrcp.pop %v1505
        %v1508 = vrcp.pop %v1506
        %v1509 = vmul.f32 %v222, %v1507
        %v1510 = vmul.f32 %v223, %v1508
        %v1511 = vmul.f32 %v224, %v1507
        %v1512 = vmul.f32 %v225, %v1508
        %v1513 = vmul.f32 %v226, %v1507
        %v1514 = vmul.f32 %v227, %v1508
        %v1515 = vmul.f32 %v228, %v1507
        %v1516 = vmul.f32 %v229, %v1508
        %1517 = vst.msk [vmem:[%s176] sm:$0xff] %vm230, %v1509
        %1518 = vst.msk [vmem:[%s176 + $0x8] sm:$0xff] %vm230, %v1510
        %1519 = vst.msk [vmem:[%s176 + $0x10] sm:$0xff] %vm230, %v1511
        %1520 = vst.msk [vmem:[%s176 + $0x18] sm:$0xff] %vm230, %v1512
        %1521 = vst.msk [vmem:[%s176 + $0x20] sm:$0xff] %vm230, %v1513
        %1522 = vst.msk [vmem:[%s176 + $0x28] sm:$0xff] %vm230, %v1514
        %1523 = vst.msk [vmem:[%s176 + $0x30] sm:$0xff] %vm230, %v1515
        %1524 = vst.msk [vmem:[%s176 + $0x38] sm:$0xff] %vm230, %v1516
        %s1525 = sand.u32 %s98, 1
        %s1526 = scalar_lea.sflag [#allocation4], %s1525
        %s1527 = sand.u32 %s98, 1
        %s1528 = smul.addr %s1527, 64
        %s1529 = scalar_lea.vmem [#allocation3], %s1528
        // Predicated region
        $region33: #{cbam_forward.1} parent=31 // pred_check
          %p1530 = pneg %p108
        $region34: #{cbam_forward.1} parent=31 // pred_check_branch
          %1532 = sbr.rel (%p1530) target = $region36
        $region35: #{cbam_forward.1} parent=31 // pred_region
          %s1534 = ssub.s32 1024, 1024
          %1535 = vsyncadd %s1526, %s1534
          %s1536 = smul.addr %s17, 8
          %s1537 = smul.addr %s1536, 128
          %s1538 = scalar_lea.hbm %s3, %s1537
          %s1539 = sshll.u32 %s1529, 4
          %s1540 = int_to_ptr.vmem [resolvable:$true] %s1539
          %1545 = dma.vmem_to_hbm [thread:$0]  %s1540, 1024, %s1538, %s1526, 128, 128, 8
        $region36: #{cbam_forward.1} parent=31 // pred_fallthru
          _
      $region32: #{cbam_forward.1} parent=5 // pred_fallthru
        _
      %p1546 = scmp.le.s32.totalorder 2, %s12
      // Predicated region
      $region37: #{cbam_forward.1} parent=5 // pred_check
        %p1547 = pneg %p1546
      $region38: #{cbam_forward.1} parent=5 // pred_check_branch
        %1549 = sbr.rel (%p1547) target = $region40
      $region39: #{cbam_forward.1} parent=5 // pred_region
        %s1550 = ssub.s32 %s12, 2
        // Predicated region
        $region41: #{cbam_forward.1} parent=39 // pred_check
          %p1551 = pneg %p114
        $region42: #{cbam_forward.1} parent=39 // pred_check_branch
          %1553 = sbr.rel (%p1551) target = $region44
        $region43: #{cbam_forward.1} parent=39 // pred_region
          %s1554 = sand.u32 %s99, 1
          %s1555 = scalar_lea.sflag [#allocation4], %s1554
          %s1556 = sand.u32 %s99, 1
          %s1557 = smul.addr %s1556, 64
          %s1558 = scalar_lea.vmem [#allocation3], %s1557
          %1559 = dma.done %s1555, 1024
        $region44: #{cbam_forward.1} parent=39 // pred_fallthru
          _
      $region40: #{cbam_forward.1} parent=5 // pred_fallthru
        _
    $region6: #{cbam_forward.1} parent=1 // loop_footer
      %s16 = sadd.s32 1, %s12
    $region7: #{cbam_forward.1} parent=1 // loop_footer_branch
      %11 = sbr.rel target = $region3
    $region8: #{cbam_forward.1} parent=1 // loop_exit
      _
    %1560 = vsyncpa [#allocation4], 1
    %s1561 = scalar_lea.sflag [#allocation4], 1
    %1562 = vsyncpa %s1561, 1

</llo_original>
